<compile_context>
chip_gen: v6e
topology: v6e:2x2x1
jax: 0.10.0
libtpu: 0.0.40
codegen_flags: <defaults>
</compile_context>

<pallas_src>
import functools

import jax
import jax.numpy as jnp
import numpy as np
from jax.experimental import pallas as pl
from jax.experimental.pallas import tpu as pltpu

# Column index layout of the packed per-channel vector table (`cols` input).
_ORIG_SHIFT, _ORIG_ISCALE = 0, 1
_BN1_G, _BN1_B, _BN2_G, _BN2_B, _BN3_G, _BN3_B = 2, 3, 4, 5, 6, 7
_FC0_B, _FC1_B, _FC2_B, _OUT_SCALE, _OUT_SHIFT = 8, 9, 10, 11, 12
_N_COLS = 13
_C1, _C2 = 16, 32            # Conv1d channel widths fixed by the module
_C_IN_PAD = 8                # xyz channels padded 3 -> 8 in VMEM only (not HBM)


def munet_kernel(
    origT_ref, pts_ref, pts_tbl_ref, cols_ref,
    w1_ref, w2_ref, w3_ref,
    fw0_ref, fw1a_ref, fw1b_ref, fw2_ref,
    o_ref,
    pts_nrm, embT,
    *, batch, n_points, d_orig, emb_dim, h0, h1, act_dim, bn_eps=1e-5,
):
    N = n_points
    cols_total = batch * N
    inv_cols = 1.0 / float(cols_total)
    cdt = w1_ref.dtype            # trunk MXU dtype (f32, or bf16 on v6e/v7x)

    cols = cols_ref[...]          # (C_max, 13) packed tiny vectors, one DMA

    def col(idx, length):         # (length, 1) column, broadcasts over lanes
        return cols[0:length, idx:idx + 1]

    # ---- proprio normalization: (x - shift) * inv_scale --------------------
    origT = (origT_ref[...] - col(_ORIG_SHIFT, d_orig)) * col(_ORIG_ISCALE, d_orig)

    # ---- point-cloud normalization -----------------------------------------
    # The (3, N) shift / inv-scale tables are shared across the batch; apply
    # them per batch slice of the (3, B*N) lane axis.  Rows 3..7 of the conv1
    # input are zeroed once so the (16, 8) @ (8, B*N) matmul sees true zeros
    # in the padded contraction rows (padding lives only in VMEM, not HBM).
    tbl = pts_tbl_ref[...]                          # (6, N) f32
    p_shift, p_iscale = tbl[0:3, :], tbl[3:6, :]
    pts_nrm[3:, :] = jnp.zeros((_C_IN_PAD - 3, cols_total), cdt)
    # TODO(synk): at production B*N replace this unrolled loop (and the whole
    # single-block body) with a grid over 128-aligned point tiles + two-pass
    # BN accumulators so the point DMA pipelines and both v7x TCs are used.
    for b in range(batch):                          # static, unrolled (B small)
        sl = pl.ds(b * N, N)
        xb = pts_ref[:, sl].astype(jnp.float32)     # element-wise math in f32
        pts_nrm[0:3, sl] = ((xb - p_shift) * p_iscale).astype(cdt)

    # ---- BatchNorm1d helper (training mode, single-pass biased stats) ------
    def bn_affine(h, g, be):
        s1 = jnp.sum(h, axis=1, keepdims=True)          # f32 accumulation
        s2 = jnp.sum(h * h, axis=1, keepdims=True)
        mu = s1 * inv_cols
        var = jnp.maximum(s2 * inv_cols - mu * mu, 0.0)  # guard cancellation
        a = g * jax.lax.rsqrt(var + bn_eps)
        return a, be - a * mu                            # y = a*h + c

    # ---- PointNet trunk (lane axis = B*N); conv bias cancels under BN ------
    h = jnp.dot(w1_ref[...], pts_nrm[...], preferred_element_type=jnp.float32)
    a, c = bn_affine(h, col(_BN1_G, _C1), col(_BN1_B, _C1))
    h = jnp.maximum(h * a + c, 0.0)

    h = jnp.dot(w2_ref[...], h.astype(cdt), preferred_element_type=jnp.float32)
    a, c = bn_affine(h, col(_BN2_G, _C2), col(_BN2_B, _C2))
    h = jnp.maximum(h * a + c, 0.0)

    h = jnp.dot(w3_ref[...], h.astype(cdt), preferred_element_type=jnp.float32)
    a3, c3 = bn_affine(h, col(_BN3_G, emb_dim), col(_BN3_B, emb_dim))

    # BN3 affine applied post-pool (exact):
    #   max_n(a*h + c) = a*max_n(h) + c  if a >= 0,  else  a*min_n(h) + c
    a3_pos = a3 >= 0.0
    for b in range(batch):                          # static, unrolled
        blk = h[:, b * N:(b + 1) * N]
        mx = jnp.max(blk, axis=1, keepdims=True)
        mn = jnp.min(blk, axis=1, keepdims=True)
        # TODO(synk): at production B write pooled columns in 128-lane groups
        # instead of width-1 masked stores.
        embT[:, pl.ds(b, 1)] = jnp.where(a3_pos, a3 * mx, a3 * mn) + c3

    # ---- MLP head (features x batch layout, f32) ---------------------------
    a0 = jnp.tanh(jnp.dot(fw0_ref[...], origT, preferred_element_type=jnp.float32)
                  + col(_FC0_B, h0))
    # fc1(concat([a0, emb])) == W1a @ a0 + W1b @ emb + b1  (no lane concat)
    a1 = jnp.tanh(jnp.dot(fw1a_ref[...], a0, preferred_element_type=jnp.float32)
                  + jnp.dot(fw1b_ref[...], embT[...], preferred_element_type=jnp.float32)
                  + col(_FC1_B, h1))
    a2 = (jnp.dot(fw2_ref[...], a1, preferred_element_type=jnp.float32)
          + col(_FC2_B, act_dim))
    o_ref[...] = a2 * col(_OUT_SCALE, act_dim) + col(_OUT_SHIFT, act_dim)   # (act, B)


def munet_forward(x, params, *, obs_dim, act_dim, pc_dim, emb_dim, hidden_sizes,
                  trunk_dtype=jnp.float32):
    B = x.shape[0]
    d_orig = obs_dim - pc_dim
    n_points = pc_dim // 3
    h0, h1 = hidden_sizes

    x = x.astype(jnp.float32)

    # proprio part, transposed to (features, batch)
    origT = x[:, :d_orig].T                                        # (d_orig, B)

    # point cloud: x[:, d_orig:] is channel-major per batch (torch .view(B,3,N)).
    # Shipped to HBM as (3, B*N) in the trunk dtype: no channel padding and
    # optionally bf16, so the dominant DMA is as small as possible.
    pc = x[:, d_orig:].reshape(B, 3, n_points)
    ptsT = jnp.transpose(pc, (1, 0, 2)).reshape(3, B * n_points).astype(trunk_dtype)

    in_shift = params["in_shift"].astype(jnp.float32)
    in_iscale = 1.0 / (params["in_scale"].astype(jnp.float32) + 1e-8)  # tiny vec

    # per-point shift / inv-scale tables stacked into one (6, N) input
    pts_tbl = jnp.concatenate([in_shift[d_orig:].reshape(3, n_points),
                               in_iscale[d_orig:].reshape(3, n_points)], axis=0)

    # all per-channel vectors packed into one (C_max, 13) table (single DMA)
    c_max = max(d_orig, _C1, _C2, emb_dim, h0, h1, act_dim)

    def colv(v):
        v = jnp.asarray(v, jnp.float32).reshape(-1)
        return jnp.pad(v, (0, c_max - v.shape[0]))

    cols = jnp.stack([
        colv(in_shift[:d_orig]), colv(in_iscale[:d_orig]),
        colv(params["bn1_g"]), colv(params["bn1_b"]),
        colv(params["bn2_g"]), colv(params["bn2_b"]),
        colv(params["bn3_g"]), colv(params["bn3_b"]),
        colv(params["fc0_b"]), colv(params["fc1_b"]), colv(params["fc2_b"]),
        colv(params["out_scale"]), colv(params["out_shift"]),
    ], axis=1)                                                     # (c_max, 13)

    # trunk weights: PyTorch Conv1d weight (C_out, C_in) used directly as W@X.
    # conv1 weight zero-padded 3 -> 8 input channels to match the VMEM-side
    # zero rows of the normalized points (padding contributes exactly 0).
    # Conv biases intentionally not passed (cancel under training-mode BN).
    w1 = jnp.pad(params["conv1_w"], ((0, 0), (0, _C_IN_PAD - 3))).astype(trunk_dtype)
    w2 = params["conv2_w"].astype(trunk_dtype)
    w3 = params["conv3_w"].astype(trunk_dtype)

    # head weights: PyTorch Linear weight (out, in) used directly (no .T).
    fw0 = params["fc0_w"].astype(jnp.float32)
    fw1a = params["fc1_w"][:, :h0].astype(jnp.float32)
    fw1b = params["fc1_w"][:, h0:].astype(jnp.float32)
    fw2 = params["fc2_w"].astype(jnp.float32)

    inputs = (origT, ptsT, pts_tbl, cols, w1, w2, w3, fw0, fw1a, fw1b, fw2)

    BN_cols = B * n_points
    flops = int(2 * BN_cols * (_C1 * _C_IN_PAD + _C2 * _C1 + emb_dim * _C2)
                + 2 * B * (h0 * d_orig + h1 * (h0 + emb_dim) + act_dim * h1)
                + 8 * BN_cols * (3 + _C1 + _C2 + emb_dim))
    transcendentals = int(B * (h0 + h1) + _C1 + _C2 + emb_dim)
    bytes_accessed = int(sum(int(np.prod(a.shape)) * a.dtype.itemsize for a in inputs)
                         + 4 * act_dim * B)

    kern = functools.partial(
        munet_kernel, batch=B, n_points=n_points, d_orig=d_orig,
        emb_dim=emb_dim, h0=h0, h1=h1, act_dim=act_dim)

    outT = pl.pallas_call(
        kern,
        out_shape=jax.ShapeDtypeStruct((act_dim, B), jnp.float32),
        in_specs=[pl.BlockSpec(memory_space=pltpu.MemorySpace.VMEM)] * len(inputs),
        out_specs=pl.BlockSpec(memory_space=pltpu.MemorySpace.VMEM),
        scratch_shapes=[pltpu.VMEM((_C_IN_PAD, BN_cols), trunk_dtype),  # conv1 input
                        pltpu.VMEM((emb_dim, B), jnp.float32)],         # pooled emb
        # 48 MiB: above every chip's default scoped limit, below v7x's 64 MiB.
        compiler_params=pltpu.CompilerParams(vmem_limit_bytes=48 * 1024 * 1024),
        cost_estimate=pl.CostEstimate(flops=flops, transcendentals=transcendentals,
                                      bytes_accessed=bytes_accessed),
    )(*inputs)
    return outT.T                                                   # (B, act_dim)


def init_params(key, obs_dim, act_dim, pc_dim, emb_dim, hidden_sizes):
    d_orig = obs_dim - pc_dim
    h0, h1 = hidden_sizes
    ks = jax.random.split(key, 16)

    def w(k, shape, fan_in):
        bound = 1.0 / np.sqrt(fan_in)
        return jax.random.uniform(k, shape, jnp.float32, -bound, bound)

    return dict(
        conv1_w=w(ks[0], (16, 3), 3), conv1_b=w(ks[1], (16,), 3),
        conv2_w=w(ks[2], (32, 16), 16), conv2_b=w(ks[3], (32,), 16),
        conv3_w=w(ks[4], (emb_dim, 32), 32), conv3_b=w(ks[5], (emb_dim,), 32),
        bn1_g=jnp.ones((16,), jnp.float32), bn1_b=jnp.zeros((16,), jnp.float32),
        bn2_g=jnp.ones((32,), jnp.float32), bn2_b=jnp.zeros((32,), jnp.float32),
        bn3_g=jnp.ones((emb_dim,), jnp.float32), bn3_b=jnp.zeros((emb_dim,), jnp.float32),
        fc0_w=w(ks[6], (h0, d_orig), d_orig), fc0_b=w(ks[7], (h0,), d_orig),
        fc1_w=w(ks[8], (h1, h0 + emb_dim), h0 + emb_dim),
        fc1_b=w(ks[9], (h1,), h0 + emb_dim),
        fc2_w=w(ks[10], (act_dim, h1), h1), fc2_b=w(ks[11], (act_dim,), h1),
        in_shift=0.1 * jax.random.normal(ks[12], (obs_dim,), jnp.float32),
        in_scale=jax.random.uniform(ks[13], (obs_dim,), jnp.float32, 0.5, 1.5),
        out_shift=0.1 * jax.random.normal(ks[14], (act_dim,), jnp.float32),
        out_scale=jax.random.uniform(ks[15], (act_dim,), jnp.float32, 0.5, 1.5),
    )


def munet_reference(x, params, *, obs_dim, act_dim, pc_dim, emb_dim, hidden_sizes):
    """Pure-JAX mirror of the PyTorch forward (training-mode BatchNorm)."""
    out = (x - params["in_shift"]) / (params["in_scale"] + 1e-8)
    B = x.shape[0]
    d_orig = obs_dim - pc_dim
    pc = out[:, d_orig:].reshape(B, 3, pc_dim // 3)  # NCL
    orig = out[:, :d_orig]

    def conv_bn(h, w, b, g, be):
        h = jnp.einsum("bcl,oc->bol", h, w) + b[None, :, None]
        mu = jnp.mean(h, axis=(0, 2), keepdims=True)
        var = jnp.mean((h - mu) ** 2, axis=(0, 2), keepdims=True)
        return (h - mu) * jax.lax.rsqrt(var + 1e-5) * g[None, :, None] + be[None, :, None]

    h = jax.nn.relu(conv_bn(pc, params["conv1_w"], params["conv1_b"],
                            params["bn1_g"], params["bn1_b"]))
    h = jax.nn.relu(conv_bn(h, params["conv2_w"], params["conv2_b"],
                            params["bn2_g"], params["bn2_b"]))
    h = conv_bn(h, params["conv3_w"], params["conv3_b"],
                params["bn3_g"], params["bn3_b"])
    emb = jnp.max(h, axis=2)  # (B, emb)

    a0 = jnp.tanh(orig @ params["fc0_w"].T + params["fc0_b"])
    cat = jnp.concatenate([a0, emb], axis=1)
    a1 = jnp.tanh(cat @ params["fc1_w"].T + params["fc1_b"])
    a2 = a1 @ params["fc2_w"].T + params["fc2_b"]
    return a2 * params["out_scale"] + params["out_shift"]


if __name__ == "__main__":
    # Small shapes consistent with the module: obs = proprio(16) + pc(3*16).
    B = 2
    n_points = 16
    pc_dim = 3 * n_points
    d_orig = 16
    obs_dim = d_orig + pc_dim
    act_dim = 8
    emb_dim = 32
    hidden_sizes = (64, 64)

    key = jax.random.PRNGKey(0)
    kp, kx = jax.random.split(key)
    params = init_params(kp, obs_dim, act_dim, pc_dim, emb_dim, hidden_sizes)
    x = jax.random.normal(kx, (B, obs_dim), jnp.float32)

    kw = dict(obs_dim=obs_dim, act_dim=act_dim, pc_dim=pc_dim,
              emb_dim=emb_dim, hidden_sizes=hidden_sizes)

    out = munet_forward(x, params, **kw)
    out = jax.block_until_ready(out)

    ref = munet_reference(x, params, **kw)
    np.testing.assert_allclose(np.asarray(out), np.asarray(ref), rtol=1e-3, atol=1e-4)

    # bf16 trunk operands in HBM / on the MXU (v6e/v7x path); BN stats, rsqrt
    # and all element-wise math stay f32.  Loose check: bf16 rounding dominates.
    out_bf16 = munet_forward(x, params, trunk_dtype=jnp.bfloat16, **kw)
    out_bf16 = jax.block_until_ready(out_bf16)
    np.testing.assert_allclose(np.asarray(out_bf16), np.asarray(ref), rtol=1e-1, atol=1e-1)

    print("KERNEL_OK")
</pallas_src>

<mosaic_0001>
module attributes {stable_mosaic.version = 11 : i64} {
  func.func @munet_kernel(%arg0: memref<16x2xf32, #tpu.memory_space<vmem>>, %arg1: memref<3x32xf32, #tpu.memory_space<vmem>>, %arg2: memref<6x16xf32, #tpu.memory_space<vmem>>, %arg3: memref<64x13xf32, #tpu.memory_space<vmem>>, %arg4: memref<16x8xf32, #tpu.memory_space<vmem>>, %arg5: memref<32x16xf32, #tpu.memory_space<vmem>>, %arg6: memref<32x32xf32, #tpu.memory_space<vmem>>, %arg7: memref<64x16xf32, #tpu.memory_space<vmem>>, %arg8: memref<64x64xf32, #tpu.memory_space<vmem>>, %arg9: memref<64x32xf32, #tpu.memory_space<vmem>>, %arg10: memref<8x64xf32, #tpu.memory_space<vmem>>, %arg11: memref<8x2xf32, #tpu.memory_space<vmem>>, %arg12: memref<8x32xf32, #tpu.memory_space<vmem>>, %arg13: memref<32x2xf32, #tpu.memory_space<vmem>>) attributes {dimension_semantics = [], scalar_prefetch = 0 : i64, scratch_operands = 2 : i64, tpu.core_type = #tpu.core_type<tc>} {
    %c0 = arith.constant 0 : index
    %c0_0 = arith.constant 0 : index
    %0 = vector.load %arg3[%c0, %c0_0] : memref<64x13xf32, #tpu.memory_space<vmem>>, vector<64x13xf32>
    %c0_1 = arith.constant 0 : index
    %c0_2 = arith.constant 0 : index
    %1 = vector.load %arg0[%c0_1, %c0_2] : memref<16x2xf32, #tpu.memory_space<vmem>>, vector<16x2xf32>
    %2 = vector.extract_strided_slice %0 {offsets = [0, 0], sizes = [16, 1], strides = [1, 1]} : vector<64x13xf32> to vector<16x1xf32>
    %3 = vector.broadcast %2 : vector<16x1xf32> to vector<16x2xf32>
    %4 = arith.subf %1, %3 : vector<16x2xf32>
    %5 = vector.extract_strided_slice %0 {offsets = [0, 1], sizes = [16, 1], strides = [1, 1]} : vector<64x13xf32> to vector<16x1xf32>
    %6 = vector.broadcast %5 : vector<16x1xf32> to vector<16x2xf32>
    %7 = arith.mulf %4, %6 : vector<16x2xf32>
    %c0_3 = arith.constant 0 : index
    %c0_4 = arith.constant 0 : index
    %8 = vector.load %arg2[%c0_3, %c0_4] : memref<6x16xf32, #tpu.memory_space<vmem>>, vector<6x16xf32>
    %9 = vector.extract_strided_slice %8 {offsets = [0, 0], sizes = [3, 16], strides = [1, 1]} : vector<6x16xf32> to vector<3x16xf32>
    %10 = vector.extract_strided_slice %8 {offsets = [3, 0], sizes = [3, 16], strides = [1, 1]} : vector<6x16xf32> to vector<3x16xf32>
    %cst = arith.constant 0.000000e+00 : f32
    %11 = vector.broadcast %cst : f32 to vector<5x32xf32>
    %c3 = arith.constant 3 : index
    %c0_5 = arith.constant 0 : index
    %12 = vector.load %arg12[%c3, %c0_5] : memref<8x32xf32, #tpu.memory_space<vmem>>, vector<5x32xf32>
    tpu.vector_store %arg12[%c3, %c0_5], %11 {strides = array<i32>} : memref<8x32xf32, #tpu.memory_space<vmem>>, vector<5x32xf32>,
    %c0_6 = arith.constant 0 : index
    %c0_7 = arith.constant 0 : index
    %13 = vector.load %arg1[%c0_6, %c0_7] : memref<3x32xf32, #tpu.memory_space<vmem>>, vector<3x16xf32>
    %14 = arith.subf %13, %9 : vector<3x16xf32>
    %15 = arith.mulf %14, %10 : vector<3x16xf32>
    %c0_8 = arith.constant 0 : index
    %c0_9 = arith.constant 0 : index
    %16 = vector.load %arg12[%c0_8, %c0_9] : memref<8x32xf32, #tpu.memory_space<vmem>>, vector<3x16xf32>
    tpu.vector_store %arg12[%c0_8, %c0_9], %15 {strides = array<i32>} : memref<8x32xf32, #tpu.memory_space<vmem>>, vector<3x16xf32>,
    %c0_10 = arith.constant 0 : index
    %c16 = arith.constant 16 : index
    %17 = vector.load %arg1[%c0_10, %c16] : memref<3x32xf32, #tpu.memory_space<vmem>>, vector<3x16xf32>
    %18 = arith.subf %17, %9 : vector<3x16xf32>
    %19 = arith.mulf %18, %10 : vector<3x16xf32>
    %c0_11 = arith.constant 0 : index
    %c16_12 = arith.constant 16 : index
    %20 = vector.load %arg12[%c0_11, %c16_12] : memref<8x32xf32, #tpu.memory_space<vmem>>, vector<3x16xf32>
    tpu.vector_store %arg12[%c0_11, %c16_12], %19 {strides = array<i32>} : memref<8x32xf32, #tpu.memory_space<vmem>>, vector<3x16xf32>,
    %c0_13 = arith.constant 0 : index
    %c0_14 = arith.constant 0 : index
    %21 = vector.load %arg4[%c0_13, %c0_14] : memref<16x8xf32, #tpu.memory_space<vmem>>, vector<16x8xf32>
    %c0_15 = arith.constant 0 : index
    %c0_16 = arith.constant 0 : index
    %22 = vector.load %arg12[%c0_15, %c0_16] : memref<8x32xf32, #tpu.memory_space<vmem>>, vector<8x32xf32>
    %cst_17 = arith.constant dense<0.000000e+00> : vector<16x32xf32>
    %23 = tpu.matmul %21, %22, %cst_17 {dimension_numbers = #tpu.dot_dimension_numbers<[1], [0], [0], [1], [0, 0, 1, 1], [], []>} : vector<16x8xf32>, vector<8x32xf32>, vector<16x32xf32> -> vector<16x32xf32>
    %24 = vector.extract_strided_slice %0 {offsets = [0, 2], sizes = [16, 1], strides = [1, 1]} : vector<64x13xf32> to vector<16x1xf32>
    %25 = vector.extract_strided_slice %0 {offsets = [0, 3], sizes = [16, 1], strides = [1, 1]} : vector<64x13xf32> to vector<16x1xf32>
    %cst_18 = arith.constant dense<0.000000e+00> : vector<16xf32>
    %26 = vector.multi_reduction <add>, %23, %cst_18 [1] : vector<16x32xf32> to vector<16xf32>
    %27 = vector.shape_cast %26 : vector<16xf32> to vector<16x1xf32>
    %28 = arith.mulf %23, %23 : vector<16x32xf32>
    %cst_19 = arith.constant dense<0.000000e+00> : vector<16xf32>
    %29 = vector.multi_reduction <add>, %28, %cst_19 [1] : vector<16x32xf32> to vector<16xf32>
    %30 = vector.shape_cast %29 : vector<16xf32> to vector<16x1xf32>
    %cst_20 = arith.constant 3.125000e-02 : f32
    %31 = vector.broadcast %cst_20 : f32 to vector<16x1xf32>
    %32 = arith.mulf %27, %31 : vector<16x1xf32>
    %cst_21 = arith.constant 3.125000e-02 : f32
    %33 = vector.broadcast %cst_21 : f32 to vector<16x1xf32>
    %34 = arith.mulf %30, %33 : vector<16x1xf32>
    %35 = arith.mulf %32, %32 : vector<16x1xf32>
    %36 = arith.subf %34, %35 : vector<16x1xf32>
    %cst_22 = arith.constant 0.000000e+00 : f32
    %37 = vector.broadcast %cst_22 : f32 to vector<16x1xf32>
    %38 = arith.maximumf %36, %37 : vector<16x1xf32>
    %cst_23 = arith.constant 9.99999974E-6 : f32
    %39 = vector.broadcast %cst_23 : f32 to vector<16x1xf32>
    %40 = arith.addf %38, %39 : vector<16x1xf32>
    %41 = math.rsqrt %40 : vector<16x1xf32>
    %42 = arith.mulf %24, %41 : vector<16x1xf32>
    %43 = arith.mulf %42, %32 : vector<16x1xf32>
    %44 = arith.subf %25, %43 : vector<16x1xf32>
    %45 = vector.broadcast %42 : vector<16x1xf32> to vector<16x32xf32>
    %46 = arith.mulf %23, %45 : vector<16x32xf32>
    %47 = vector.broadcast %44 : vector<16x1xf32> to vector<16x32xf32>
    %48 = arith.addf %46, %47 : vector<16x32xf32>
    %cst_24 = arith.constant 0.000000e+00 : f32
    %49 = vector.broadcast %cst_24 : f32 to vector<16x32xf32>
    %50 = arith.maximumf %48, %49 : vector<16x32xf32>
    %c0_25 = arith.constant 0 : index
    %c0_26 = arith.constant 0 : index
    %51 = vector.load %arg5[%c0_25, %c0_26] : memref<32x16xf32, #tpu.memory_space<vmem>>, vector<32x16xf32>
    %cst_27 = arith.constant dense<0.000000e+00> : vector<32x32xf32>
    %52 = tpu.matmul %51, %50, %cst_27 {dimension_numbers = #tpu.dot_dimension_numbers<[1], [0], [0], [1], [0, 0, 1, 1], [], []>} : vector<32x16xf32>, vector<16x32xf32>, vector<32x32xf32> -> vector<32x32xf32>
    %53 = vector.extract_strided_slice %0 {offsets = [0, 4], sizes = [32, 1], strides = [1, 1]} : vector<64x13xf32> to vector<32x1xf32>
    %54 = vector.extract_strided_slice %0 {offsets = [0, 5], sizes = [32, 1], strides = [1, 1]} : vector<64x13xf32> to vector<32x1xf32>
    %cst_28 = arith.constant dense<0.000000e+00> : vector<32xf32>
    %55 = vector.multi_reduction <add>, %52, %cst_28 [1] : vector<32x32xf32> to vector<32xf32>
    %56 = vector.shape_cast %55 : vector<32xf32> to vector<32x1xf32>
    %57 = arith.mulf %52, %52 : vector<32x32xf32>
    %cst_29 = arith.constant dense<0.000000e+00> : vector<32xf32>
    %58 = vector.multi_reduction <add>, %57, %cst_29 [1] : vector<32x32xf32> to vector<32xf32>
    %59 = vector.shape_cast %58 : vector<32xf32> to vector<32x1xf32>
    %cst_30 = arith.constant 3.125000e-02 : f32
    %60 = vector.broadcast %cst_30 : f32 to vector<32x1xf32>
    %61 = arith.mulf %56, %60 : vector<32x1xf32>
    %cst_31 = arith.constant 3.125000e-02 : f32
    %62 = vector.broadcast %cst_31 : f32 to vector<32x1xf32>
    %63 = arith.mulf %59, %62 : vector<32x1xf32>
    %64 = arith.mulf %61, %61 : vector<32x1xf32>
    %65 = arith.subf %63, %64 : vector<32x1xf32>
    %cst_32 = arith.constant 0.000000e+00 : f32
    %66 = vector.broadcast %cst_32 : f32 to vector<32x1xf32>
    %67 = arith.maximumf %65, %66 : vector<32x1xf32>
    %cst_33 = arith.constant 9.99999974E-6 : f32
    %68 = vector.broadcast %cst_33 : f32 to vector<32x1xf32>
    %69 = arith.addf %67, %68 : vector<32x1xf32>
    %70 = math.rsqrt %69 : vector<32x1xf32>
    %71 = arith.mulf %53, %70 : vector<32x1xf32>
    %72 = arith.mulf %71, %61 : vector<32x1xf32>
    %73 = arith.subf %54, %72 : vector<32x1xf32>
    %74 = vector.broadcast %71 : vector<32x1xf32> to vector<32x32xf32>
    %75 = arith.mulf %52, %74 : vector<32x32xf32>
    %76 = vector.broadcast %73 : vector<32x1xf32> to vector<32x32xf32>
    %77 = arith.addf %75, %76 : vector<32x32xf32>
    %cst_34 = arith.constant 0.000000e+00 : f32
    %78 = vector.broadcast %cst_34 : f32 to vector<32x32xf32>
    %79 = arith.maximumf %77, %78 : vector<32x32xf32>
    %c0_35 = arith.constant 0 : index
    %c0_36 = arith.constant 0 : index
    %80 = vector.load %arg6[%c0_35, %c0_36] : memref<32x32xf32, #tpu.memory_space<vmem>>, vector<32x32xf32>
    %cst_37 = arith.constant dense<0.000000e+00> : vector<32x32xf32>
    %81 = tpu.matmul %80, %79, %cst_37 {dimension_numbers = #tpu.dot_dimension_numbers<[1], [0], [0], [1], [0, 0, 1, 1], [], []>} : vector<32x32xf32>, vector<32x32xf32>, vector<32x32xf32> -> vector<32x32xf32>
    %82 = vector.extract_strided_slice %0 {offsets = [0, 6], sizes = [32, 1], strides = [1, 1]} : vector<64x13xf32> to vector<32x1xf32>
    %83 = vector.extract_strided_slice %0 {offsets = [0, 7], sizes = [32, 1], strides = [1, 1]} : vector<64x13xf32> to vector<32x1xf32>
    %cst_38 = arith.constant dense<0.000000e+00> : vector<32xf32>
    %84 = vector.multi_reduction <add>, %81, %cst_38 [1] : vector<32x32xf32> to vector<32xf32>
    %85 = vector.shape_cast %84 : vector<32xf32> to vector<32x1xf32>
    %86 = arith.mulf %81, %81 : vector<32x32xf32>
    %cst_39 = arith.constant dense<0.000000e+00> : vector<32xf32>
    %87 = vector.multi_reduction <add>, %86, %cst_39 [1] : vector<32x32xf32> to vector<32xf32>
    %88 = vector.shape_cast %87 : vector<32xf32> to vector<32x1xf32>
    %cst_40 = arith.constant 3.125000e-02 : f32
    %89 = vector.broadcast %cst_40 : f32 to vector<32x1xf32>
    %90 = arith.mulf %85, %89 : vector<32x1xf32>
    %cst_41 = arith.constant 3.125000e-02 : f32
    %91 = vector.broadcast %cst_41 : f32 to vector<32x1xf32>
    %92 = arith.mulf %88, %91 : vector<32x1xf32>
    %93 = arith.mulf %90, %90 : vector<32x1xf32>
    %94 = arith.subf %92, %93 : vector<32x1xf32>
    %cst_42 = arith.constant 0.000000e+00 : f32
    %95 = vector.broadcast %cst_42 : f32 to vector<32x1xf32>
    %96 = arith.maximumf %94, %95 : vector<32x1xf32>
    %cst_43 = arith.constant 9.99999974E-6 : f32
    %97 = vector.broadcast %cst_43 : f32 to vector<32x1xf32>
    %98 = arith.addf %96, %97 : vector<32x1xf32>
    %99 = math.rsqrt %98 : vector<32x1xf32>
    %100 = arith.mulf %82, %99 : vector<32x1xf32>
    %101 = arith.mulf %100, %90 : vector<32x1xf32>
    %102 = arith.subf %83, %101 : vector<32x1xf32>
    %cst_44 = arith.constant 0.000000e+00 : f32
    %103 = vector.broadcast %cst_44 : f32 to vector<32x1xf32>
    %104 = arith.cmpf oge, %100, %103 : vector<32x1xf32>
    %105 = vector.extract_strided_slice %81 {offsets = [0, 0], sizes = [32, 16], strides = [1, 1]} : vector<32x32xf32> to vector<32x16xf32>
    %cst_45 = arith.constant dense<0xFF800000> : vector<32xf32>
    %106 = vector.multi_reduction <maximumf>, %105, %cst_45 [1] : vector<32x16xf32> to vector<32xf32>
    %107 = vector.shape_cast %106 : vector<32xf32> to vector<32x1xf32>
    %cst_46 = arith.constant dense<0x7F800000> : vector<32xf32>
    %108 = vector.multi_reduction <minimumf>, %105, %cst_46 [1] : vector<32x16xf32> to vector<32xf32>
    %109 = vector.shape_cast %108 : vector<32xf32> to vector<32x1xf32>
    %110 = arith.mulf %100, %107 : vector<32x1xf32>
    %111 = arith.mulf %100, %109 : vector<32x1xf32>
    %112 = arith.select %104, %110, %111 : vector<32x1xi1>, vector<32x1xf32>
    %113 = arith.addf %112, %102 : vector<32x1xf32>
    %c0_47 = arith.constant 0 : index
    %c0_48 = arith.constant 0 : index
    %114 = vector.load %arg13[%c0_47, %c0_48] : memref<32x2xf32, #tpu.memory_space<vmem>>, vector<32x1xf32>
    tpu.vector_store %arg13[%c0_47, %c0_48], %113 {strides = array<i32>} : memref<32x2xf32, #tpu.memory_space<vmem>>, vector<32x1xf32>,
    %115 = vector.extract_strided_slice %81 {offsets = [0, 16], sizes = [32, 16], strides = [1, 1]} : vector<32x32xf32> to vector<32x16xf32>
    %cst_49 = arith.constant dense<0xFF800000> : vector<32xf32>
    %116 = vector.multi_reduction <maximumf>, %115, %cst_49 [1] : vector<32x16xf32> to vector<32xf32>
    %117 = vector.shape_cast %116 : vector<32xf32> to vector<32x1xf32>
    %cst_50 = arith.constant dense<0x7F800000> : vector<32xf32>
    %118 = vector.multi_reduction <minimumf>, %115, %cst_50 [1] : vector<32x16xf32> to vector<32xf32>
    %119 = vector.shape_cast %118 : vector<32xf32> to vector<32x1xf32>
    %120 = arith.mulf %100, %117 : vector<32x1xf32>
    %121 = arith.mulf %100, %119 : vector<32x1xf32>
    %122 = arith.select %104, %120, %121 : vector<32x1xi1>, vector<32x1xf32>
    %123 = arith.addf %122, %102 : vector<32x1xf32>
    %c0_51 = arith.constant 0 : index
    %c1 = arith.constant 1 : index
    %124 = vector.load %arg13[%c0_51, %c1] : memref<32x2xf32, #tpu.memory_space<vmem>>, vector<32x1xf32>
    tpu.vector_store %arg13[%c0_51, %c1], %123 {strides = array<i32>} : memref<32x2xf32, #tpu.memory_space<vmem>>, vector<32x1xf32>,
    %c0_52 = arith.constant 0 : index
    %c0_53 = arith.constant 0 : index
    %125 = vector.load %arg7[%c0_52, %c0_53] : memref<64x16xf32, #tpu.memory_space<vmem>>, vector<64x16xf32>
    %cst_54 = arith.constant dense<0.000000e+00> : vector<64x2xf32>
    %126 = tpu.matmul %125, %7, %cst_54 {dimension_numbers = #tpu.dot_dimension_numbers<[1], [0], [0], [1], [0, 0, 1, 1], [], []>} : vector<64x16xf32>, vector<16x2xf32>, vector<64x2xf32> -> vector<64x2xf32>
    %127 = vector.extract_strided_slice %0 {offsets = [0, 8], sizes = [64, 1], strides = [1, 1]} : vector<64x13xf32> to vector<64x1xf32>
    %128 = vector.broadcast %127 : vector<64x1xf32> to vector<64x2xf32>
    %129 = arith.addf %126, %128 : vector<64x2xf32>
    %130 = math.tanh %129 : vector<64x2xf32>
    %c0_55 = arith.constant 0 : index
    %c0_56 = arith.constant 0 : index
    %131 = vector.load %arg8[%c0_55, %c0_56] : memref<64x64xf32, #tpu.memory_space<vmem>>, vector<64x64xf32>
    %cst_57 = arith.constant dense<0.000000e+00> : vector<64x2xf32>
    %132 = tpu.matmul %131, %130, %cst_57 {dimension_numbers = #tpu.dot_dimension_numbers<[1], [0], [0], [1], [0, 0, 1, 1], [], []>} : vector<64x64xf32>, vector<64x2xf32>, vector<64x2xf32> -> vector<64x2xf32>
    %c0_58 = arith.constant 0 : index
    %c0_59 = arith.constant 0 : index
    %133 = vector.load %arg9[%c0_58, %c0_59] : memref<64x32xf32, #tpu.memory_space<vmem>>, vector<64x32xf32>
    %c0_60 = arith.constant 0 : index
    %c0_61 = arith.constant 0 : index
    %134 = vector.load %arg13[%c0_60, %c0_61] : memref<32x2xf32, #tpu.memory_space<vmem>>, vector<32x2xf32>
    %cst_62 = arith.constant dense<0.000000e+00> : vector<64x2xf32>
    %135 = tpu.matmul %133, %134, %cst_62 {dimension_numbers = #tpu.dot_dimension_numbers<[1], [0], [0], [1], [0, 0, 1, 1], [], []>} : vector<64x32xf32>, vector<32x2xf32>, vector<64x2xf32> -> vector<64x2xf32>
    %136 = arith.addf %132, %135 : vector<64x2xf32>
    %137 = vector.extract_strided_slice %0 {offsets = [0, 9], sizes = [64, 1], strides = [1, 1]} : vector<64x13xf32> to vector<64x1xf32>
    %138 = vector.broadcast %137 : vector<64x1xf32> to vector<64x2xf32>
    %139 = arith.addf %136, %138 : vector<64x2xf32>
    %140 = math.tanh %139 : vector<64x2xf32>
    %c0_63 = arith.constant 0 : index
    %c0_64 = arith.constant 0 : index
    %141 = vector.load %arg10[%c0_63, %c0_64] : memref<8x64xf32, #tpu.memory_space<vmem>>, vector<8x64xf32>
    %cst_65 = arith.constant dense<0.000000e+00> : vector<8x2xf32>
    %142 = tpu.matmul %141, %140, %cst_65 {dimension_numbers = #tpu.dot_dimension_numbers<[1], [0], [0], [1], [0, 0, 1, 1], [], []>} : vector<8x64xf32>, vector<64x2xf32>, vector<8x2xf32> -> vector<8x2xf32>
    %143 = vector.extract_strided_slice %0 {offsets = [0, 10], sizes = [8, 1], strides = [1, 1]} : vector<64x13xf32> to vector<8x1xf32>
    %144 = vector.broadcast %143 : vector<8x1xf32> to vector<8x2xf32>
    %145 = arith.addf %142, %144 : vector<8x2xf32>
    %146 = vector.extract_strided_slice %0 {offsets = [0, 11], sizes = [8, 1], strides = [1, 1]} : vector<64x13xf32> to vector<8x1xf32>
    %147 = vector.broadcast %146 : vector<8x1xf32> to vector<8x2xf32>
    %148 = arith.mulf %145, %147 : vector<8x2xf32>
    %149 = vector.extract_strided_slice %0 {offsets = [0, 12], sizes = [8, 1], strides = [1, 1]} : vector<64x13xf32> to vector<8x1xf32>
    %150 = vector.broadcast %149 : vector<8x1xf32> to vector<8x2xf32>
    %151 = arith.addf %148, %150 : vector<8x2xf32>
    %c0_66 = arith.constant 0 : index
    %c0_67 = arith.constant 0 : index
    %152 = vector.load %arg11[%c0_66, %c0_67] : memref<8x2xf32, #tpu.memory_space<vmem>>, vector<8x2xf32>
    tpu.vector_store %arg11[%c0_66, %c0_67], %151 {strides = array<i32>} : memref<8x2xf32, #tpu.memory_space<vmem>>, vector<8x2xf32>,
    return
  }
}

</mosaic_0001>

<llo_original>
// kernel: tpu_custom_call.1
$region0: #{tpu_custom_call.1}
  #allocation0 [shape = 'u32[]', space=smem, size = 0x4, offset = 0x4, fixed_abs, tag = 'smem constant byte address 0x4 - core index']
  #allocation1 [shape = 'u32[144,128]{1,0:T(1,128)}', space=vmem, size = 0x12000, scoped, tag = 'internal scratch']
  #allocation2 [shape = 'f32[8,32]{1,0:T(8,128)}', space=vmem, size = 0x1000, scoped, tag = 'scratch operand']
  #allocation3 [shape = 'f32[32,2]{1,0:T(8,128)}', space=vmem, size = 0x4000, scoped, tag = 'scratch operand']
  %s0 = inlined_call_operand.vmem [shape: f32[16,2], index: 0, kind: input, shape index: {}]
  %s1 = inlined_call_operand.vmem [shape: f32[3,32], index: 1, kind: input, shape index: {}]
  %s2 = inlined_call_operand.vmem [shape: f32[6,16], index: 2, kind: input, shape index: {}]
  %s3 = inlined_call_operand.vmem [shape: f32[64,13], index: 3, kind: input, shape index: {}]
  %s4 = inlined_call_operand.vmem [shape: f32[16,8], index: 4, kind: input, shape index: {}]
  %s5 = inlined_call_operand.vmem [shape: f32[32,16], index: 5, kind: input, shape index: {}]
  %s6 = inlined_call_operand.vmem [shape: f32[32,32], index: 6, kind: input, shape index: {}]
  %s7 = inlined_call_operand.vmem [shape: f32[64,16], index: 7, kind: input, shape index: {}]
  %s8 = inlined_call_operand.vmem [shape: f32[64,64], index: 8, kind: input, shape index: {}]
  %s9 = inlined_call_operand.vmem [shape: f32[64,32], index: 9, kind: input, shape index: {}]
  %s10 = inlined_call_operand.vmem [shape: f32[8,64], index: 10, kind: input, shape index: {}]
  %s11 = inlined_call_operand.vmem [shape: f32[8,2], index: 11, kind: output, shape index: {}]
  %s12 = sld [smem:[#allocation0]]
  $region54: #{tpu_custom_call.1} parent=0
    _
  %s14 = ssub.s32 1, %s12
  %s15 = scalar_select 0, %s14, %s12
  // Predicated region
  $region2: #{tpu_custom_call.1} parent=0 // pred_check
    _
  $region3: #{tpu_custom_call.1} parent=0 // pred_check_branch
    %17 = sbr.rel (0) target = $region5
  $region4: #{tpu_custom_call.1} parent=0 // pred_region
    _
  $region5: #{tpu_custom_call.1} parent=0 // pred_fallthru
    _
  // Predicated region
  $region6: #{tpu_custom_call.1} parent=0 // pred_check
    _
  $region7: #{tpu_custom_call.1} parent=0 // pred_check_branch
    %19 = sbr.rel (0) target = $region9
  $region8: #{tpu_custom_call.1} parent=0 // pred_region
    _
  $region9: #{tpu_custom_call.1} parent=0 // pred_fallthru
    _
  // Predicated region
  $region10: #{tpu_custom_call.1} parent=0 // pred_check
    _
  $region11: #{tpu_custom_call.1} parent=0 // pred_check_branch
    %21 = sbr.rel (0) target = $region13
  $region12: #{tpu_custom_call.1} parent=0 // pred_region
    _
  $region13: #{tpu_custom_call.1} parent=0 // pred_fallthru
    _
  // Predicated region
  $region14: #{tpu_custom_call.1} parent=0 // pred_check
    _
  $region15: #{tpu_custom_call.1} parent=0 // pred_check_branch
    %23 = sbr.rel (0) target = $region17
  $region16: #{tpu_custom_call.1} parent=0 // pred_region
    _
  $region17: #{tpu_custom_call.1} parent=0 // pred_fallthru
    _
  // Predicated region
  $region18: #{tpu_custom_call.1} parent=0 // pred_check
    _
  $region19: #{tpu_custom_call.1} parent=0 // pred_check_branch
    %25 = sbr.rel (0) target = $region21
  $region20: #{tpu_custom_call.1} parent=0 // pred_region
    _
  $region21: #{tpu_custom_call.1} parent=0 // pred_fallthru
    _
  // Predicated region
  $region22: #{tpu_custom_call.1} parent=0 // pred_check
    _
  $region23: #{tpu_custom_call.1} parent=0 // pred_check_branch
    %27 = sbr.rel (0) target = $region25
  $region24: #{tpu_custom_call.1} parent=0 // pred_region
    _
  $region25: #{tpu_custom_call.1} parent=0 // pred_fallthru
    _
  // Predicated region
  $region26: #{tpu_custom_call.1} parent=0 // pred_check
    _
  $region27: #{tpu_custom_call.1} parent=0 // pred_check_branch
    %29 = sbr.rel (0) target = $region29
  $region28: #{tpu_custom_call.1} parent=0 // pred_region
    _
  $region29: #{tpu_custom_call.1} parent=0 // pred_fallthru
    _
  // Predicated region
  $region30: #{tpu_custom_call.1} parent=0 // pred_check
    _
  $region31: #{tpu_custom_call.1} parent=0 // pred_check_branch
    %31 = sbr.rel (0) target = $region33
  $region32: #{tpu_custom_call.1} parent=0 // pred_region
    _
  $region33: #{tpu_custom_call.1} parent=0 // pred_fallthru
    _
  // Predicated region
  $region34: #{tpu_custom_call.1} parent=0 // pred_check
    _
  $region35: #{tpu_custom_call.1} parent=0 // pred_check_branch
    %33 = sbr.rel (0) target = $region37
  $region36: #{tpu_custom_call.1} parent=0 // pred_region
    _
  $region37: #{tpu_custom_call.1} parent=0 // pred_fallthru
    _
  // Predicated region
  $region38: #{tpu_custom_call.1} parent=0 // pred_check
    _
  $region39: #{tpu_custom_call.1} parent=0 // pred_check_branch
    %35 = sbr.rel (0) target = $region41
  $region40: #{tpu_custom_call.1} parent=0 // pred_region
    _
  $region41: #{tpu_custom_call.1} parent=0 // pred_fallthru
    _
  // Predicated region
  $region42: #{tpu_custom_call.1} parent=0 // pred_check
    _
  $region43: #{tpu_custom_call.1} parent=0 // pred_check_branch
    %37 = sbr.rel (0) target = $region45
  $region44: #{tpu_custom_call.1} parent=0 // pred_region
    _
  $region45: #{tpu_custom_call.1} parent=0 // pred_fallthru
    _
  %v38 = vld [vmem:[%s3] sm:$0xff]
  %v39 = vld [vmem:[%s3 + $0x8] sm:$0xff]
  %v40 = vld [vmem:[%s3 + $0x10] sm:$0xff]
  %v41 = vld [vmem:[%s3 + $0x18] sm:$0xff]
  %v42 = vld [vmem:[%s3 + $0x20] sm:$0xff]
  %v43 = vld [vmem:[%s3 + $0x28] sm:$0xff]
  %v44 = vld [vmem:[%s3 + $0x30] sm:$0xff]
  %v45 = vld [vmem:[%s3 + $0x38] sm:$0xff]
  %v46 = vld [vmem:[%s0] sm:$0xff]
  %v47 = vld [vmem:[%s0 + $0x8] sm:$0xff]
  %49 = vset.pattern.permute.xlu0 0
  %50 = vperm.xlu0 %49, %v38
  %v51 = vpop.permute.xlu0 %50
  %54 = vset.pattern.permute.xlu0 0
  %55 = vperm.xlu0 %54, %v39
  %v56 = vpop.permute.xlu0 %55
  %v58 = vsub.f32 %v46, %v51
  %v59 = vsub.f32 %v47, %v56
  %60 = vset.pattern.permute.xlu0 1
  %61 = vperm.xlu0 %60, %v38
  %v62 = vpop.permute.xlu0 %61
  %64 = vset.pattern.permute.xlu0 1
  %65 = vperm.xlu0 %64, %v39
  %v66 = vpop.permute.xlu0 %65
  %v68 = vmul.f32 %v58, %v62
  %v69 = vmul.f32 %v59, %v66
  %v70 = vld [vmem:[%s2] sm:$0x3f]
  %vm71 = vcmask 258048
  %72 = vst.msk [vmem:[#allocation2 + $0x3] sm:$0x1f] %vm71, 0.0
  %v73 = vld [vmem:[%s1] sm:$0x7]
  %v74 = vsub.f32 %v73, %v70
  %v76 = vrot.slane %v70, 3
  %v78 = vmul.f32 %v74, %v76
  %vm79 = vcmask 124928
  %80 = vst.msk [vmem:[#allocation2] sm:$0x7] %vm79, %v78
  %v81 = vld [vmem:[%s1] sm:$0x7]
  %82 = vrot.lane.b32.xlu0 %v70, 16
  %v83 = vpop.permute.xlu0 %82
  %v85 = vsub.f32 %v81, %v83
  %86 = vrot.lane.b32.xlu0 %v76, 16
  %v87 = vpop.permute.xlu0 %86
  %v89 = vmul.f32 %v85, %v87
  %vm90 = vcmask 256128
  %91 = vst.msk [vmem:[#allocation2] sm:$0x7] %vm90, %v89
  %v92 = vld [vmem:[%s4] sm:$0xff]
  %v93 = vld [vmem:[%s4 + $0x8] sm:$0xff]
  %v94 = vld [vmem:[#allocation2] sm:$0xff]
  %vm95 = vcmask 64512
  %v97 = vsel %vm95, %v92, 0
  %v100 = vsel %vm95, %v93, 0
  %102 = vmatprep.subr.mxu0 0.0
  %103 = vmatpush1.msra.mxu0 0.0
  %104 = vmatprep.subr.mxu0 0.0
  %105 = vmatpush1.msra.mxu0 0.0
  %106 = vmatprep.subr.mxu0 0.0
  %107 = vmatpush1.msra.mxu0 0.0
  %108 = vmatprep.subr.mxu0 0.0
  %109 = vmatpush1.msra.mxu0 0.0
  %110 = vmatprep.subr.mxu0 0.0
  %111 = vmatpush1.msra.mxu0 0.0
  %112 = vmatprep.subr.mxu0 0.0
  %113 = vmatpush1.msra.mxu0 0.0
  %114 = vmatprep.subr.mxu0 0.0
  %115 = vmatpush1.msra.mxu0 0.0
  %116 = vmatprep.subr.mxu0 0.0
  %117 = vmatpush1.msra.mxu0 0.0
  %118 = vmatprep.subr.mxu0 0.0
  %119 = vmatpush1.msra.mxu0 0.0
  %120 = vmatprep.subr.mxu0 0.0
  %121 = vmatpush1.msra.mxu0 0.0
  %122 = vmatprep.subr.mxu0 0.0
  %123 = vmatpush1.msra.mxu0 0.0
  %124 = vmatprep.subr.mxu0 0.0
  %125 = vmatpush1.msra.mxu0 0.0
  %126 = vmatprep.subr.mxu0 0.0
  %127 = vmatpush1.msra.mxu0 0.0
  %128 = vmatprep.subr.mxu0 0.0
  %129 = vmatpush1.msra.mxu0 0.0
  %130 = vmatprep.subr.mxu0 0.0
  %131 = vmatpush1.msra.mxu0 0.0
  %132 = vmatprep.subr.mxu0 0.0
  %133 = vmatpush1.msra.mxu0 %v94
  %134 = vmatprep.subr.mxu0 0.0
  %135 = vmatpush2.msra.mxu0 0.0
  %136 = vmatprep.subr.mxu0 0.0
  %137 = vmatpush2.msra.mxu0 0.0
  %138 = vmatprep.subr.mxu0 0.0
  %139 = vmatpush2.msra.mxu0 0.0
  %140 = vmatprep.subr.mxu0 0.0
  %141 = vmatpush2.msra.mxu0 0.0
  %142 = vmatprep.subr.mxu0 0.0
  %143 = vmatpush2.msra.mxu0 0.0
  %144 = vmatprep.subr.mxu0 0.0
  %145 = vmatpush2.msra.mxu0 0.0
  %146 = vmatprep.subr.mxu0 0.0
  %147 = vmatpush2.msra.mxu0 0.0
  %148 = vmatprep.subr.mxu0 0.0
  %149 = vmatpush2.msra.mxu0 0.0
  %150 = vmatprep.subr.mxu0 0.0
  %151 = vmatpush2.msra.mxu0 0.0
  %152 = vmatprep.subr.mxu0 0.0
  %153 = vmatpush2.msra.mxu0 0.0
  %154 = vmatprep.subr.mxu0 0.0
  %155 = vmatpush2.msra.mxu0 0.0
  %156 = vmatprep.subr.mxu0 0.0
  %157 = vmatpush2.msra.mxu0 0.0
  %158 = vmatprep.subr.mxu0 0.0
  %159 = vmatpush2.msra.mxu0 0.0
  %160 = vmatprep.subr.mxu0 0.0
  %161 = vmatpush2.msra.mxu0 0.0
  %162 = vmatprep.subr.mxu0 0.0
  %163 = vmatpush2.msra.mxu0 0.0
  %164 = vmatprep.subr.mxu0 0.0
  %165 = vmatpush2.msra.mxu0 0.0
  %166 = vmatprep.mubr.f32.mxu0 0.0
  %167 = vmatmul.mubr.f32.gmra.mxu0 %v97
  %v168 = vpop.f32.mrf.mxu0
  %v169 = vadd.f32 0.0, %v168
  %v170 = vpop.f32.mrf.mxu0
  %171 = vmatprep.mubr.f32.mxu0 0.0
  %172 = vmatmul.mubr.f32.gmra.mxu0 %v100
  %v173 = vpop.f32.mrf.mxu0
  %v174 = vadd.f32 0.0, %v173
  %v175 = vpop.f32.mrf.mxu0
  %176 = vdwg.mxu0
  %vm177 = vcmask 261120
  %v178 = vsel %vm177, %v169, 0.0
  %179 = vadd.xlane.f32.xlu0 %v178
  %v180 = vpop.xlane.xlu0 %179
  %v181 = vsel %vm177, %v174, 0.0
  %182 = vadd.xlane.f32.xlu0 %v181
  %v183 = vpop.xlane.xlu0 %182
  %v184 = vmul.f32 %v169, %v169
  %v185 = vmul.f32 %v174, %v174
  %v186 = vsel %vm177, %v184, 0.0
  %187 = vadd.xlane.f32.xlu0 %v186
  %v188 = vpop.xlane.xlu0 %187
  %v189 = vsel %vm177, %v185, 0.0
  %190 = vadd.xlane.f32.xlu0 %v189
  %v191 = vpop.xlane.xlu0 %190
  %v192 = vmul.f32 %v180, 0.03125
  %v193 = vmul.f32 %v183, 0.03125
  %v194 = vmul.f32 %v188, 0.03125
  %v195 = vmul.f32 %v191, 0.03125
  %v196 = vmul.f32 %v192, %v192
  %v197 = vmul.f32 %v193, %v193
  %v198 = vsub.f32 %v194, %v196
  %v199 = vsub.f32 %v195, %v197
  %v200 = vmax.f32 %v198, 0.0
  %v201 = vmax.f32 %v199, 0.0
  %v202 = vadd.f32 %v200, 1e-05
  %v203 = vadd.f32 %v201, 1e-05
  %v204 = vrsqrt.pop %v202
  %v205 = vrsqrt.pop %v203
  %v206 = vmul.f32 %v38, %v204
  %v207 = vmul.f32 %v39, %v205
  %v208 = vmul.f32 %v206, %v192
  %v209 = vmul.f32 %v207, %v193
  %212 = vrot.lane.b32.xlu0 %v208, 1
  %v213 = vpop.permute.xlu0 %212
  %214 = vrot.lane.b32.xlu0 %v209, 1
  %v215 = vpop.permute.xlu0 %214
  %v218 = vsub.f32 %v38, %v213
  %v219 = vsub.f32 %v39, %v215
  %221 = vset.pattern.permute.xlu0 2
  %222 = vperm.xlu0 %221, %v206
  %v223 = vpop.permute.xlu0 %222
  %226 = vset.pattern.permute.xlu0 2
  %227 = vperm.xlu0 %226, %v207
  %v228 = vpop.permute.xlu0 %227
  %v230 = vmul.f32 %v169, %v223
  %v231 = vmul.f32 %v174, %v228
  %233 = vset.pattern.permute.xlu0 3
  %234 = vperm.xlu0 %233, %v218
  %v235 = vpop.permute.xlu0 %234
  %238 = vset.pattern.permute.xlu0 3
  %239 = vperm.xlu0 %238, %v219
  %v240 = vpop.permute.xlu0 %239
  %v242 = vadd.f32 %v230, %v235
  %v243 = vadd.f32 %v231, %v240
  %v244 = vmax.f32 %v242, 0.0
  %v245 = vmax.f32 %v243, 0.0
  %v246 = vld [vmem:[%s5] sm:$0xff]
  %v247 = vld [vmem:[%s5 + $0x8] sm:$0xff]
  %v248 = vld [vmem:[%s5 + $0x10] sm:$0xff]
  %v249 = vld [vmem:[%s5 + $0x18] sm:$0xff]
  %vm250 = vcmask 130048
  %v252 = vsel %vm250, %v246, 0
  %v255 = vsel %vm250, %v247, 0
  %v258 = vsel %vm250, %v248, 0
  %v261 = vsel %vm250, %v249, 0
  %263 = vmatprep.subr.mxu0 0.0
  %264 = vmatpush1.msra.mxu0 0.0
  %265 = vmatprep.subr.mxu0 0.0
  %266 = vmatpush1.msra.mxu0 0.0
  %267 = vmatprep.subr.mxu0 0.0
  %268 = vmatpush1.msra.mxu0 0.0
  %269 = vmatprep.subr.mxu0 0.0
  %270 = vmatpush1.msra.mxu0 0.0
  %271 = vmatprep.subr.mxu0 0.0
  %272 = vmatpush1.msra.mxu0 0.0
  %273 = vmatprep.subr.mxu0 0.0
  %274 = vmatpush1.msra.mxu0 0.0
  %275 = vmatprep.subr.mxu0 0.0
  %276 = vmatpush1.msra.mxu0 0.0
  %277 = vmatprep.subr.mxu0 0.0
  %278 = vmatpush1.msra.mxu0 0.0
  %279 = vmatprep.subr.mxu0 0.0
  %280 = vmatpush1.msra.mxu0 0.0
  %281 = vmatprep.subr.mxu0 0.0
  %282 = vmatpush1.msra.mxu0 0.0
  %283 = vmatprep.subr.mxu0 0.0
  %284 = vmatpush1.msra.mxu0 0.0
  %285 = vmatprep.subr.mxu0 0.0
  %286 = vmatpush1.msra.mxu0 0.0
  %287 = vmatprep.subr.mxu0 0.0
  %288 = vmatpush1.msra.mxu0 0.0
  %289 = vmatprep.subr.mxu0 0.0
  %290 = vmatpush1.msra.mxu0 0.0
  %291 = vmatprep.subr.mxu0 0.0
  %292 = vmatpush1.msra.mxu0 %v245
  %293 = vmatprep.subr.mxu0 0.0
  %294 = vmatpush1.msra.mxu0 %v244
  %295 = vmatprep.subr.mxu0 0.0
  %296 = vmatpush2.msra.mxu0 0.0
  %297 = vmatprep.subr.mxu0 0.0
  %298 = vmatpush2.msra.mxu0 0.0
  %299 = vmatprep.subr.mxu0 0.0
  %300 = vmatpush2.msra.mxu0 0.0
  %301 = vmatprep.subr.mxu0 0.0
  %302 = vmatpush2.msra.mxu0 0.0
  %303 = vmatprep.subr.mxu0 0.0
  %304 = vmatpush2.msra.mxu0 0.0
  %305 = vmatprep.subr.mxu0 0.0
  %306 = vmatpush2.msra.mxu0 0.0
  %307 = vmatprep.subr.mxu0 0.0
  %308 = vmatpush2.msra.mxu0 0.0
  %309 = vmatprep.subr.mxu0 0.0
  %310 = vmatpush2.msra.mxu0 0.0
  %311 = vmatprep.subr.mxu0 0.0
  %312 = vmatpush2.msra.mxu0 0.0
  %313 = vmatprep.subr.mxu0 0.0
  %314 = vmatpush2.msra.mxu0 0.0
  %315 = vmatprep.subr.mxu0 0.0
  %316 = vmatpush2.msra.mxu0 0.0
  %317 = vmatprep.subr.mxu0 0.0
  %318 = vmatpush2.msra.mxu0 0.0
  %319 = vmatprep.subr.mxu0 0.0
  %320 = vmatpush2.msra.mxu0 0.0
  %321 = vmatprep.subr.mxu0 0.0
  %322 = vmatpush2.msra.mxu0 0.0
  %323 = vmatprep.subr.mxu0 0.0
  %324 = vmatpush2.msra.mxu0 0.0
  %325 = vmatprep.subr.mxu0 0.0
  %326 = vmatpush2.msra.mxu0 0.0
  %327 = vmatprep.mubr.f32.mxu0 0.0
  %328 = vmatmul.mubr.f32.gmra.mxu0 %v252
  %v329 = vpop.f32.mrf.mxu0
  %v330 = vadd.f32 0.0, %v329
  %v331 = vpop.f32.mrf.mxu0
  %332 = vmatprep.mubr.f32.mxu0 0.0
  %333 = vmatmul.mubr.f32.gmra.mxu0 %v255
  %v334 = vpop.f32.mrf.mxu0
  %v335 = vadd.f32 0.0, %v334
  %v336 = vpop.f32.mrf.mxu0
  %337 = vmatprep.mubr.f32.mxu0 0.0
  %338 = vmatmul.mubr.f32.gmra.mxu0 %v258
  %v339 = vpop.f32.mrf.mxu0
  %v340 = vadd.f32 0.0, %v339
  %v341 = vpop.f32.mrf.mxu0
  %342 = vmatprep.mubr.f32.mxu0 0.0
  %343 = vmatmul.mubr.f32.gmra.mxu0 %v261
  %v344 = vpop.f32.mrf.mxu0
  %v345 = vadd.f32 0.0, %v344
  %v346 = vpop.f32.mrf.mxu0
  %347 = vdwg.mxu0
  %v348 = vsel %vm177, %v330, 0.0
  %349 = vadd.xlane.f32.xlu0 %v348
  %v350 = vpop.xlane.xlu0 %349
  %v351 = vsel %vm177, %v335, 0.0
  %352 = vadd.xlane.f32.xlu0 %v351
  %v353 = vpop.xlane.xlu0 %352
  %v354 = vsel %vm177, %v340, 0.0
  %355 = vadd.xlane.f32.xlu0 %v354
  %v356 = vpop.xlane.xlu0 %355
  %v357 = vsel %vm177, %v345, 0.0
  %358 = vadd.xlane.f32.xlu0 %v357
  %v359 = vpop.xlane.xlu0 %358
  %v360 = vmul.f32 %v330, %v330
  %v361 = vmul.f32 %v335, %v335
  %v362 = vmul.f32 %v340, %v340
  %v363 = vmul.f32 %v345, %v345
  %v364 = vsel %vm177, %v360, 0.0
  %365 = vadd.xlane.f32.xlu0 %v364
  %v366 = vpop.xlane.xlu0 %365
  %v367 = vsel %vm177, %v361, 0.0
  %368 = vadd.xlane.f32.xlu0 %v367
  %v369 = vpop.xlane.xlu0 %368
  %v370 = vsel %vm177, %v362, 0.0
  %371 = vadd.xlane.f32.xlu0 %v370
  %v372 = vpop.xlane.xlu0 %371
  %v373 = vsel %vm177, %v363, 0.0
  %374 = vadd.xlane.f32.xlu0 %v373
  %v375 = vpop.xlane.xlu0 %374
  %v376 = vmul.f32 %v350, 0.03125
  %v377 = vmul.f32 %v353, 0.03125
  %v378 = vmul.f32 %v356, 0.03125
  %v379 = vmul.f32 %v359, 0.03125
  %v380 = vmul.f32 %v366, 0.03125
  %v381 = vmul.f32 %v369, 0.03125
  %v382 = vmul.f32 %v372, 0.03125
  %v383 = vmul.f32 %v375, 0.03125
  %v384 = vmul.f32 %v376, %v376
  %v385 = vmul.f32 %v377, %v377
  %v386 = vmul.f32 %v378, %v378
  %v387 = vmul.f32 %v379, %v379
  %v388 = vsub.f32 %v380, %v384
  %v389 = vsub.f32 %v381, %v385
  %v390 = vsub.f32 %v382, %v386
  %v391 = vsub.f32 %v383, %v387
  %v392 = vmax.f32 %v388, 0.0
  %v393 = vmax.f32 %v389, 0.0
  %v394 = vmax.f32 %v390, 0.0
  %v395 = vmax.f32 %v391, 0.0
  %v396 = vadd.f32 %v392, 1e-05
  %v397 = vadd.f32 %v393, 1e-05
  %v398 = vadd.f32 %v394, 1e-05
  %v399 = vadd.f32 %v395, 1e-05
  %v400 = vrsqrt.pop %v396
  %v401 = vrsqrt.pop %v397
  %v402 = vrsqrt.pop %v398
  %v403 = vrsqrt.pop %v399
  %v404 = vmul.f32 %v38, %v400
  %v405 = vmul.f32 %v39, %v401
  %v406 = vmul.f32 %v40, %v402
  %v407 = vmul.f32 %v41, %v403
  %v408 = vmul.f32 %v404, %v376
  %v409 = vmul.f32 %v405, %v377
  %v410 = vmul.f32 %v406, %v378
  %v411 = vmul.f32 %v407, %v379
  %416 = vrot.lane.b32.xlu0 %v408, 1
  %v417 = vpop.permute.xlu0 %416
  %418 = vrot.lane.b32.xlu0 %v409, 1
  %v419 = vpop.permute.xlu0 %418
  %420 = vrot.lane.b32.xlu0 %v410, 1
  %v421 = vpop.permute.xlu0 %420
  %422 = vrot.lane.b32.xlu0 %v411, 1
  %v423 = vpop.permute.xlu0 %422
  %v428 = vsub.f32 %v38, %v417
  %v429 = vsub.f32 %v39, %v419
  %v430 = vsub.f32 %v40, %v421
  %v431 = vsub.f32 %v41, %v423
  %433 = vset.pattern.permute.xlu0 4
  %434 = vperm.xlu0 %433, %v404
  %v435 = vpop.permute.xlu0 %434
  %438 = vset.pattern.permute.xlu0 4
  %439 = vperm.xlu0 %438, %v405
  %v440 = vpop.permute.xlu0 %439
  %443 = vset.pattern.permute.xlu0 4
  %444 = vperm.xlu0 %443, %v406
  %v445 = vpop.permute.xlu0 %444
  %448 = vset.pattern.permute.xlu0 4
  %449 = vperm.xlu0 %448, %v407
  %v450 = vpop.permute.xlu0 %449
  %v452 = vmul.f32 %v330, %v435
  %v453 = vmul.f32 %v335, %v440
  %v454 = vmul.f32 %v340, %v445
  %v455 = vmul.f32 %v345, %v450
  %457 = vset.pattern.permute.xlu0 5
  %458 = vperm.xlu0 %457, %v428
  %v459 = vpop.permute.xlu0 %458
  %462 = vset.pattern.permute.xlu0 5
  %463 = vperm.xlu0 %462, %v429
  %v464 = vpop.permute.xlu0 %463
  %467 = vset.pattern.permute.xlu0 5
  %468 = vperm.xlu0 %467, %v430
  %v469 = vpop.permute.xlu0 %468
  %472 = vset.pattern.permute.xlu0 5
  %473 = vperm.xlu0 %472, %v431
  %v474 = vpop.permute.xlu0 %473
  %v476 = vadd.f32 %v452, %v459
  %v477 = vadd.f32 %v453, %v464
  %v478 = vadd.f32 %v454, %v469
  %v479 = vadd.f32 %v455, %v474
  %v480 = vmax.f32 %v476, 0.0
  %v481 = vmax.f32 %v477, 0.0
  %v482 = vmax.f32 %v478, 0.0
  %v483 = vmax.f32 %v479, 0.0
  %v484 = vld [vmem:[%s6] sm:$0xff]
  %v485 = vld [vmem:[%s6 + $0x8] sm:$0xff]
  %v486 = vld [vmem:[%s6 + $0x10] sm:$0xff]
  %v487 = vld [vmem:[%s6 + $0x18] sm:$0xff]
  %v489 = vsel %vm177, %v484, 0
  %v492 = vsel %vm177, %v485, 0
  %v495 = vsel %vm177, %v486, 0
  %v498 = vsel %vm177, %v487, 0
  %500 = vmatprep.subr.mxu0 0.0
  %501 = vmatpush1.msra.mxu0 0.0
  %502 = vmatprep.subr.mxu0 0.0
  %503 = vmatpush1.msra.mxu0 0.0
  %504 = vmatprep.subr.mxu0 0.0
  %505 = vmatpush1.msra.mxu0 0.0
  %506 = vmatprep.subr.mxu0 0.0
  %507 = vmatpush1.msra.mxu0 0.0
  %508 = vmatprep.subr.mxu0 0.0
  %509 = vmatpush1.msra.mxu0 0.0
  %510 = vmatprep.subr.mxu0 0.0
  %511 = vmatpush1.msra.mxu0 0.0
  %512 = vmatprep.subr.mxu0 0.0
  %513 = vmatpush1.msra.mxu0 0.0
  %514 = vmatprep.subr.mxu0 0.0
  %515 = vmatpush1.msra.mxu0 0.0
  %516 = vmatprep.subr.mxu0 0.0
  %517 = vmatpush1.msra.mxu0 0.0
  %518 = vmatprep.subr.mxu0 0.0
  %519 = vmatpush1.msra.mxu0 0.0
  %520 = vmatprep.subr.mxu0 0.0
  %521 = vmatpush1.msra.mxu0 0.0
  %522 = vmatprep.subr.mxu0 0.0
  %523 = vmatpush1.msra.mxu0 0.0
  %524 = vmatprep.subr.mxu0 0.0
  %525 = vmatpush1.msra.mxu0 %v483
  %526 = vmatprep.subr.mxu0 0.0
  %527 = vmatpush1.msra.mxu0 %v482
  %528 = vmatprep.subr.mxu0 0.0
  %529 = vmatpush1.msra.mxu0 %v481
  %530 = vmatprep.subr.mxu0 0.0
  %531 = vmatpush1.msra.mxu0 %v480
  %532 = vmatprep.subr.mxu0 0.0
  %533 = vmatpush2.msra.mxu0 0.0
  %534 = vmatprep.subr.mxu0 0.0
  %535 = vmatpush2.msra.mxu0 0.0
  %536 = vmatprep.subr.mxu0 0.0
  %537 = vmatpush2.msra.mxu0 0.0
  %538 = vmatprep.subr.mxu0 0.0
  %539 = vmatpush2.msra.mxu0 0.0
  %540 = vmatprep.subr.mxu0 0.0
  %541 = vmatpush2.msra.mxu0 0.0
  %542 = vmatprep.subr.mxu0 0.0
  %543 = vmatpush2.msra.mxu0 0.0
  %544 = vmatprep.subr.mxu0 0.0
  %545 = vmatpush2.msra.mxu0 0.0
  %546 = vmatprep.subr.mxu0 0.0
  %547 = vmatpush2.msra.mxu0 0.0
  %548 = vmatprep.subr.mxu0 0.0
  %549 = vmatpush2.msra.mxu0 0.0
  %550 = vmatprep.subr.mxu0 0.0
  %551 = vmatpush2.msra.mxu0 0.0
  %552 = vmatprep.subr.mxu0 0.0
  %553 = vmatpush2.msra.mxu0 0.0
  %554 = vmatprep.subr.mxu0 0.0
  %555 = vmatpush2.msra.mxu0 0.0
  %556 = vmatprep.subr.mxu0 0.0
  %557 = vmatpush2.msra.mxu0 0.0
  %558 = vmatprep.subr.mxu0 0.0
  %559 = vmatpush2.msra.mxu0 0.0
  %560 = vmatprep.subr.mxu0 0.0
  %561 = vmatpush2.msra.mxu0 0.0
  %562 = vmatprep.subr.mxu0 0.0
  %563 = vmatpush2.msra.mxu0 0.0
  %564 = vmatprep.mubr.f32.mxu0 0.0
  %565 = vmatmul.mubr.f32.gmra.mxu0 %v489
  %v566 = vpop.f32.mrf.mxu0
  %v567 = vadd.f32 0.0, %v566
  %v568 = vpop.f32.mrf.mxu0
  %569 = vmatprep.mubr.f32.mxu0 0.0
  %570 = vmatmul.mubr.f32.gmra.mxu0 %v492
  %v571 = vpop.f32.mrf.mxu0
  %v572 = vadd.f32 0.0, %v571
  %v573 = vpop.f32.mrf.mxu0
  %574 = vmatprep.mubr.f32.mxu0 0.0
  %575 = vmatmul.mubr.f32.gmra.mxu0 %v495
  %v576 = vpop.f32.mrf.mxu0
  %v577 = vadd.f32 0.0, %v576
  %v578 = vpop.f32.mrf.mxu0
  %579 = vmatprep.mubr.f32.mxu0 0.0
  %580 = vmatmul.mubr.f32.gmra.mxu0 %v498
  %v581 = vpop.f32.mrf.mxu0
  %v582 = vadd.f32 0.0, %v581
  %v583 = vpop.f32.mrf.mxu0
  %584 = vdwg.mxu0
  %v585 = vsel %vm177, %v567, 0.0
  %586 = vadd.xlane.f32.xlu0 %v585
  %v587 = vpop.xlane.xlu0 %586
  %v588 = vsel %vm177, %v572, 0.0
  %589 = vadd.xlane.f32.xlu0 %v588
  %v590 = vpop.xlane.xlu0 %589
  %v591 = vsel %vm177, %v577, 0.0
  %592 = vadd.xlane.f32.xlu0 %v591
  %v593 = vpop.xlane.xlu0 %592
  %v594 = vsel %vm177, %v582, 0.0
  %595 = vadd.xlane.f32.xlu0 %v594
  %v596 = vpop.xlane.xlu0 %595
  %v597 = vmul.f32 %v567, %v567
  %v598 = vmul.f32 %v572, %v572
  %v599 = vmul.f32 %v577, %v577
  %v600 = vmul.f32 %v582, %v582
  %v601 = vsel %vm177, %v597, 0.0
  %602 = vadd.xlane.f32.xlu0 %v601
  %v603 = vpop.xlane.xlu0 %602
  %v604 = vsel %vm177, %v598, 0.0
  %605 = vadd.xlane.f32.xlu0 %v604
  %v606 = vpop.xlane.xlu0 %605
  %v607 = vsel %vm177, %v599, 0.0
  %608 = vadd.xlane.f32.xlu0 %v607
  %v609 = vpop.xlane.xlu0 %608
  %v610 = vsel %vm177, %v600, 0.0
  %611 = vadd.xlane.f32.xlu0 %v610
  %v612 = vpop.xlane.xlu0 %611
  %v613 = vmul.f32 %v587, 0.03125
  %v614 = vmul.f32 %v590, 0.03125
  %v615 = vmul.f32 %v593, 0.03125
  %v616 = vmul.f32 %v596, 0.03125
  %v617 = vmul.f32 %v603, 0.03125
  %v618 = vmul.f32 %v606, 0.03125
  %v619 = vmul.f32 %v609, 0.03125
  %v620 = vmul.f32 %v612, 0.03125
  %v621 = vmul.f32 %v613, %v613
  %v622 = vmul.f32 %v614, %v614
  %v623 = vmul.f32 %v615, %v615
  %v624 = vmul.f32 %v616, %v616
  %v625 = vsub.f32 %v617, %v621
  %v626 = vsub.f32 %v618, %v622
  %v627 = vsub.f32 %v619, %v623
  %v628 = vsub.f32 %v620, %v624
  %v629 = vmax.f32 %v625, 0.0
  %v630 = vmax.f32 %v626, 0.0
  %v631 = vmax.f32 %v627, 0.0
  %v632 = vmax.f32 %v628, 0.0
  %v633 = vadd.f32 %v629, 1e-05
  %v634 = vadd.f32 %v630, 1e-05
  %v635 = vadd.f32 %v631, 1e-05
  %v636 = vadd.f32 %v632, 1e-05
  %v637 = vrsqrt.pop %v633
  %v638 = vrsqrt.pop %v634
  %v639 = vrsqrt.pop %v635
  %v640 = vrsqrt.pop %v636
  %v641 = vmul.f32 %v38, %v637
  %v642 = vmul.f32 %v39, %v638
  %v643 = vmul.f32 %v40, %v639
  %v644 = vmul.f32 %v41, %v640
  %v645 = vmul.f32 %v641, %v613
  %v646 = vmul.f32 %v642, %v614
  %v647 = vmul.f32 %v643, %v615
  %v648 = vmul.f32 %v644, %v616
  %653 = vrot.lane.b32.xlu0 %v645, 1
  %v654 = vpop.permute.xlu0 %653
  %655 = vrot.lane.b32.xlu0 %v646, 1
  %v656 = vpop.permute.xlu0 %655
  %657 = vrot.lane.b32.xlu0 %v647, 1
  %v658 = vpop.permute.xlu0 %657
  %659 = vrot.lane.b32.xlu0 %v648, 1
  %v660 = vpop.permute.xlu0 %659
  %v665 = vsub.f32 %v38, %v654
  %v666 = vsub.f32 %v39, %v656
  %v667 = vsub.f32 %v40, %v658
  %v668 = vsub.f32 %v41, %v660
  %vm669 = vcmp.ge.f32.partialorder %v641, 0.0
  %vm670 = vcmp.ge.f32.partialorder %v642, 0.0
  %vm671 = vcmp.ge.f32.partialorder %v643, 0.0
  %vm672 = vcmp.ge.f32.partialorder %v644, 0.0
  %v673 = vsel %vm250, %v567, -inf
  %674 = vmax.xlane.f32.xlu0 %v673
  %v675 = vpop.xlane.xlu0 %674
  %v676 = vsel %vm250, %v572, -inf
  %677 = vmax.xlane.f32.xlu0 %v676
  %v678 = vpop.xlane.xlu0 %677
  %v679 = vsel %vm250, %v577, -inf
  %680 = vmax.xlane.f32.xlu0 %v679
  %v681 = vpop.xlane.xlu0 %680
  %v682 = vsel %vm250, %v582, -inf
  %683 = vmax.xlane.f32.xlu0 %v682
  %v684 = vpop.xlane.xlu0 %683
  %v685 = vsel %vm250, %v567, inf
  %686 = vmin.xlane.f32.xlu0 %v685
  %v687 = vpop.xlane.xlu0 %686
  %v688 = vsel %vm250, %v572, inf
  %689 = vmin.xlane.f32.xlu0 %v688
  %v690 = vpop.xlane.xlu0 %689
  %v691 = vsel %vm250, %v577, inf
  %692 = vmin.xlane.f32.xlu0 %v691
  %v693 = vpop.xlane.xlu0 %692
  %v694 = vsel %vm250, %v582, inf
  %695 = vmin.xlane.f32.xlu0 %v694
  %v696 = vpop.xlane.xlu0 %695
  %v697 = vmul.f32 %v641, %v675
  %v698 = vmul.f32 %v642, %v678
  %v699 = vmul.f32 %v643, %v681
  %v700 = vmul.f32 %v644, %v684
  %v701 = vmul.f32 %v641, %v687
  %v702 = vmul.f32 %v642, %v690
  %v703 = vmul.f32 %v643, %v693
  %v704 = vmul.f32 %v644, %v696
  %v705 = vsel %vm669, %v697, %v701
  %v706 = vsel %vm670, %v698, %v702
  %v707 = vsel %vm671, %v699, %v703
  %v708 = vsel %vm672, %v700, %v704
  %713 = vrot.lane.b32.xlu0 %v665, 127
  %v714 = vpop.permute.xlu0 %713
  %715 = vrot.lane.b32.xlu0 %v666, 127
  %v716 = vpop.permute.xlu0 %715
  %717 = vrot.lane.b32.xlu0 %v667, 127
  %v718 = vpop.permute.xlu0 %717
  %719 = vrot.lane.b32.xlu0 %v668, 127
  %v720 = vpop.permute.xlu0 %719
  %v725 = vadd.f32 %v705, %v714
  %v726 = vadd.f32 %v706, %v716
  %v727 = vadd.f32 %v707, %v718
  %v728 = vadd.f32 %v708, %v720
  %733 = vrot.lane.b32.xlu0 %v725, 122
  %v734 = vpop.permute.xlu0 %733
  %735 = vrot.lane.b32.xlu0 %v726, 122
  %v736 = vpop.permute.xlu0 %735
  %737 = vrot.lane.b32.xlu0 %v727, 122
  %v738 = vpop.permute.xlu0 %737
  %739 = vrot.lane.b32.xlu0 %v728, 122
  %v740 = vpop.permute.xlu0 %739
  %vm745 = vcmask 7168
  %746 = vst.msk [vmem:[#allocation3] sm:$0xff] %vm745, %v734
  %747 = vst.msk [vmem:[#allocation3 + $0x8] sm:$0xff] %vm745, %v736
  %748 = vst.msk [vmem:[#allocation3 + $0x10] sm:$0xff] %vm745, %v738
  %749 = vst.msk [vmem:[#allocation3 + $0x18] sm:$0xff] %vm745, %v740
  %vm750 = vcmask 261248
  %v751 = vsel %vm750, %v567, -inf
  %752 = vmax.xlane.f32.xlu0 %v751
  %v753 = vpop.xlane.xlu0 %752
  %v754 = vsel %vm750, %v572, -inf
  %755 = vmax.xlane.f32.xlu0 %v754
  %v756 = vpop.xlane.xlu0 %755
  %v757 = vsel %vm750, %v577, -inf
  %758 = vmax.xlane.f32.xlu0 %v757
  %v759 = vpop.xlane.xlu0 %758
  %v760 = vsel %vm750, %v582, -inf
  %761 = vmax.xlane.f32.xlu0 %v760
  %v762 = vpop.xlane.xlu0 %761
  %v763 = vsel %vm750, %v567, inf
  %764 = vmin.xlane.f32.xlu0 %v763
  %v765 = vpop.xlane.xlu0 %764
  %v766 = vsel %vm750, %v572, inf
  %767 = vmin.xlane.f32.xlu0 %v766
  %v768 = vpop.xlane.xlu0 %767
  %v769 = vsel %vm750, %v577, inf
  %770 = vmin.xlane.f32.xlu0 %v769
  %v771 = vpop.xlane.xlu0 %770
  %v772 = vsel %vm750, %v582, inf
  %773 = vmin.xlane.f32.xlu0 %v772
  %v774 = vpop.xlane.xlu0 %773
  %v775 = vmul.f32 %v641, %v753
  %v776 = vmul.f32 %v642, %v756
  %v777 = vmul.f32 %v643, %v759
  %v778 = vmul.f32 %v644, %v762
  %v779 = vmul.f32 %v641, %v765
  %v780 = vmul.f32 %v642, %v768
  %v781 = vmul.f32 %v643, %v771
  %v782 = vmul.f32 %v644, %v774
  %v783 = vsel %vm669, %v775, %v779
  %v784 = vsel %vm670, %v776, %v780
  %v785 = vsel %vm671, %v777, %v781
  %v786 = vsel %vm672, %v778, %v782
  %v787 = vadd.f32 %v783, %v714
  %v788 = vadd.f32 %v784, %v716
  %v789 = vadd.f32 %v785, %v718
  %v790 = vadd.f32 %v786, %v720
  %795 = vrot.lane.b32.xlu0 %v787, 123
  %v796 = vpop.permute.xlu0 %795
  %797 = vrot.lane.b32.xlu0 %v788, 123
  %v798 = vpop.permute.xlu0 %797
  %799 = vrot.lane.b32.xlu0 %v789, 123
  %v800 = vpop.permute.xlu0 %799
  %801 = vrot.lane.b32.xlu0 %v790, 123
  %v802 = vpop.permute.xlu0 %801
  %vm807 = vcmask 15368
  %808 = vst.msk [vmem:[#allocation3] sm:$0xff] %vm807, %v796
  %809 = vst.msk [vmem:[#allocation3 + $0x8] sm:$0xff] %vm807, %v798
  %810 = vst.msk [vmem:[#allocation3 + $0x10] sm:$0xff] %vm807, %v800
  %811 = vst.msk [vmem:[#allocation3 + $0x18] sm:$0xff] %vm807, %v802
  %v812 = vld [vmem:[%s7] sm:$0xff]
  %v813 = vld [vmem:[%s7 + $0x8] sm:$0xff]
  %v814 = vld [vmem:[%s7 + $0x10] sm:$0xff]
  %v815 = vld [vmem:[%s7 + $0x18] sm:$0xff]
  %v816 = vld [vmem:[%s7 + $0x20] sm:$0xff]
  %v817 = vld [vmem:[%s7 + $0x28] sm:$0xff]
  %v818 = vld [vmem:[%s7 + $0x30] sm:$0xff]
  %v819 = vld [vmem:[%s7 + $0x38] sm:$0xff]
  %820 = vset.pattern.permute.xlu0 8
  %821 = vperm.xlu0 %820, %v38
  %v822 = vpop.permute.xlu0 %821
  %824 = vset.pattern.permute.xlu0 8
  %825 = vperm.xlu0 %824, %v39
  %v826 = vpop.permute.xlu0 %825
  %829 = vset.pattern.permute.xlu0 8
  %830 = vperm.xlu0 %829, %v40
  %v831 = vpop.permute.xlu0 %830
  %834 = vset.pattern.permute.xlu0 8
  %835 = vperm.xlu0 %834, %v41
  %v836 = vpop.permute.xlu0 %835
  %839 = vset.pattern.permute.xlu0 8
  %840 = vperm.xlu0 %839, %v42
  %v841 = vpop.permute.xlu0 %840
  %844 = vset.pattern.permute.xlu0 8
  %845 = vperm.xlu0 %844, %v43
  %v846 = vpop.permute.xlu0 %845
  %849 = vset.pattern.permute.xlu0 8
  %850 = vperm.xlu0 %849, %v44
  %v851 = vpop.permute.xlu0 %850
  %854 = vset.pattern.permute.xlu0 8
  %855 = vperm.xlu0 %854, %v45
  %v856 = vpop.permute.xlu0 %855
  %v859 = vsel %vm250, %v812, 0
  %v862 = vsel %vm250, %v813, 0
  %v865 = vsel %vm250, %v814, 0
  %v868 = vsel %vm250, %v815, 0
  %v871 = vsel %vm250, %v816, 0
  %v874 = vsel %vm250, %v817, 0
  %v877 = vsel %vm250, %v818, 0
  %v880 = vsel %vm250, %v819, 0
  %882 = vmatprep.subr.mxu0 0.0
  %883 = vmatpush1.msra.mxu0 0.0
  %884 = vmatprep.subr.mxu0 0.0
  %885 = vmatpush1.msra.mxu0 0.0
  %886 = vmatprep.subr.mxu0 0.0
  %887 = vmatpush1.msra.mxu0 0.0
  %888 = vmatprep.subr.mxu0 0.0
  %889 = vmatpush1.msra.mxu0 0.0
  %890 = vmatprep.subr.mxu0 0.0
  %891 = vmatpush1.msra.mxu0 0.0
  %892 = vmatprep.subr.mxu0 0.0
  %893 = vmatpush1.msra.mxu0 0.0
  %894 = vmatprep.subr.mxu0 0.0
  %895 = vmatpush1.msra.mxu0 0.0
  %896 = vmatprep.subr.mxu0 0.0
  %897 = vmatpush1.msra.mxu0 0.0
  %898 = vmatprep.subr.mxu0 0.0
  %899 = vmatpush1.msra.mxu0 0.0
  %900 = vmatprep.subr.mxu0 0.0
  %901 = vmatpush1.msra.mxu0 0.0
  %902 = vmatprep.subr.mxu0 0.0
  %903 = vmatpush1.msra.mxu0 0.0
  %904 = vmatprep.subr.mxu0 0.0
  %905 = vmatpush1.msra.mxu0 0.0
  %906 = vmatprep.subr.mxu0 0.0
  %907 = vmatpush1.msra.mxu0 0.0
  %908 = vmatprep.subr.mxu0 0.0
  %909 = vmatpush1.msra.mxu0 0.0
  %910 = vmatprep.subr.mxu0 0.0
  %911 = vmatpush1.msra.mxu0 %v69
  %912 = vmatprep.subr.mxu0 0.0
  %913 = vmatpush1.msra.mxu0 %v68
  %914 = vmatprep.subr.mxu0 0.0
  %915 = vmatpush2.msra.mxu0 0.0
  %916 = vmatprep.subr.mxu0 0.0
  %917 = vmatpush2.msra.mxu0 0.0
  %918 = vmatprep.subr.mxu0 0.0
  %919 = vmatpush2.msra.mxu0 0.0
  %920 = vmatprep.subr.mxu0 0.0
  %921 = vmatpush2.msra.mxu0 0.0
  %922 = vmatprep.subr.mxu0 0.0
  %923 = vmatpush2.msra.mxu0 0.0
  %924 = vmatprep.subr.mxu0 0.0
  %925 = vmatpush2.msra.mxu0 0.0
  %926 = vmatprep.subr.mxu0 0.0
  %927 = vmatpush2.msra.mxu0 0.0
  %928 = vmatprep.subr.mxu0 0.0
  %929 = vmatpush2.msra.mxu0 0.0
  %930 = vmatprep.subr.mxu0 0.0
  %931 = vmatpush2.msra.mxu0 0.0
  %932 = vmatprep.subr.mxu0 0.0
  %933 = vmatpush2.msra.mxu0 0.0
  %934 = vmatprep.subr.mxu0 0.0
  %935 = vmatpush2.msra.mxu0 0.0
  %936 = vmatprep.subr.mxu0 0.0
  %937 = vmatpush2.msra.mxu0 0.0
  %938 = vmatprep.subr.mxu0 0.0
  %939 = vmatpush2.msra.mxu0 0.0
  %940 = vmatprep.subr.mxu0 0.0
  %941 = vmatpush2.msra.mxu0 0.0
  %942 = vmatprep.subr.mxu0 0.0
  %943 = vmatpush2.msra.mxu0 0.0
  %944 = vmatprep.subr.mxu0 0.0
  %945 = vmatpush2.msra.mxu0 0.0
  %946 = vmatprep.mubr.f32.mxu0 0.0
  %947 = vmatmul.mubr.f32.gmra.mxu0 %v859
  %v948 = vpop.f32.mrf.mxu0
  %v949 = vadd.f32 %v822, %v948
  %v950 = vpop.f32.mrf.mxu0
  %951 = vmatprep.mubr.f32.mxu0 0.0
  %952 = vmatmul.mubr.f32.gmra.mxu0 %v862
  %v953 = vpop.f32.mrf.mxu0
  %v954 = vadd.f32 %v826, %v953
  %v955 = vpop.f32.mrf.mxu0
  %956 = vmatprep.mubr.f32.mxu0 0.0
  %957 = vmatmul.mubr.f32.gmra.mxu0 %v865
  %v958 = vpop.f32.mrf.mxu0
  %v959 = vadd.f32 %v831, %v958
  %v960 = vpop.f32.mrf.mxu0
  %961 = vmatprep.mubr.f32.mxu0 0.0
  %962 = vmatmul.mubr.f32.gmra.mxu0 %v868
  %v963 = vpop.f32.mrf.mxu0
  %v964 = vadd.f32 %v836, %v963
  %v965 = vpop.f32.mrf.mxu0
  %966 = vmatprep.mubr.f32.mxu0 0.0
  %967 = vmatmul.mubr.f32.gmra.mxu0 %v871
  %v968 = vpop.f32.mrf.mxu0
  %v969 = vadd.f32 %v841, %v968
  %v970 = vpop.f32.mrf.mxu0
  %971 = vmatprep.mubr.f32.mxu0 0.0
  %972 = vmatmul.mubr.f32.gmra.mxu0 %v874
  %v973 = vpop.f32.mrf.mxu0
  %v974 = vadd.f32 %v846, %v973
  %v975 = vpop.f32.mrf.mxu0
  %976 = vmatprep.mubr.f32.mxu0 0.0
  %977 = vmatmul.mubr.f32.gmra.mxu0 %v877
  %v978 = vpop.f32.mrf.mxu0
  %v979 = vadd.f32 %v851, %v978
  %v980 = vpop.f32.mrf.mxu0
  %981 = vmatprep.mubr.f32.mxu0 0.0
  %982 = vmatmul.mubr.f32.gmra.mxu0 %v880
  %v983 = vpop.f32.mrf.mxu0
  %v984 = vadd.f32 %v856, %v983
  %v985 = vpop.f32.mrf.mxu0
  %986 = vdwg.mxu0
  %v987 = vtanh.pop %v949
  %v988 = vtanh.pop %v954
  %v989 = vtanh.pop %v959
  %v990 = vtanh.pop %v964
  %v991 = vtanh.pop %v969
  %v992 = vtanh.pop %v974
  %v993 = vtanh.pop %v979
  %v994 = vtanh.pop %v984
  %v995 = vld [vmem:[%s8] sm:$0xff]
  %v996 = vld [vmem:[%s8 + $0x8] sm:$0xff]
  %v997 = vld [vmem:[%s8 + $0x10] sm:$0xff]
  %v998 = vld [vmem:[%s8 + $0x18] sm:$0xff]
  %v999 = vld [vmem:[%s8 + $0x20] sm:$0xff]
  %v1000 = vld [vmem:[%s8 + $0x28] sm:$0xff]
  %v1001 = vld [vmem:[%s8 + $0x30] sm:$0xff]
  %v1002 = vld [vmem:[%s8 + $0x38] sm:$0xff]
  %v1003 = vld [vmem:[%s9] sm:$0xff]
  %v1004 = vld [vmem:[%s9 + $0x8] sm:$0xff]
  %v1005 = vld [vmem:[%s9 + $0x10] sm:$0xff]
  %v1006 = vld [vmem:[%s9 + $0x18] sm:$0xff]
  %v1007 = vld [vmem:[%s9 + $0x20] sm:$0xff]
  %v1008 = vld [vmem:[%s9 + $0x28] sm:$0xff]
  %v1009 = vld [vmem:[%s9 + $0x30] sm:$0xff]
  %v1010 = vld [vmem:[%s9 + $0x38] sm:$0xff]
  %v1011 = vld [vmem:[#allocation3] sm:$0xff]
  %v1012 = vld [vmem:[#allocation3 + $0x8] sm:$0xff]
  %v1013 = vld [vmem:[#allocation3 + $0x10] sm:$0xff]
  %v1014 = vld [vmem:[#allocation3 + $0x18] sm:$0xff]
  %v1016 = vsel %vm177, %v1003, 0
  %v1019 = vsel %vm177, %v1004, 0
  %v1022 = vsel %vm177, %v1005, 0
  %v1025 = vsel %vm177, %v1006, 0
  %v1028 = vsel %vm177, %v1007, 0
  %v1031 = vsel %vm177, %v1008, 0
  %v1034 = vsel %vm177, %v1009, 0
  %v1037 = vsel %vm177, %v1010, 0
  %1039 = vmatprep.subr.mxu0 0.0
  %1040 = vmatpush1.msra.mxu0 0.0
  %1041 = vmatprep.subr.mxu0 0.0
  %1042 = vmatpush1.msra.mxu0 0.0
  %1043 = vmatprep.subr.mxu0 0.0
  %1044 = vmatpush1.msra.mxu0 0.0
  %1045 = vmatprep.subr.mxu0 0.0
  %1046 = vmatpush1.msra.mxu0 0.0
  %1047 = vmatprep.subr.mxu0 0.0
  %1048 = vmatpush1.msra.mxu0 0.0
  %1049 = vmatprep.subr.mxu0 0.0
  %1050 = vmatpush1.msra.mxu0 0.0
  %1051 = vmatprep.subr.mxu0 0.0
  %1052 = vmatpush1.msra.mxu0 0.0
  %1053 = vmatprep.subr.mxu0 0.0
  %1054 = vmatpush1.msra.mxu0 0.0
  %1055 = vmatprep.subr.mxu0 0.0
  %1056 = vmatpush1.msra.mxu0 0.0
  %1057 = vmatprep.subr.mxu0 0.0
  %1058 = vmatpush1.msra.mxu0 0.0
  %1059 = vmatprep.subr.mxu0 0.0
  %1060 = vmatpush1.msra.mxu0 0.0
  %1061 = vmatprep.subr.mxu0 0.0
  %1062 = vmatpush1.msra.mxu0 0.0
  %1063 = vmatprep.subr.mxu0 0.0
  %1064 = vmatpush1.msra.mxu0 %v1014
  %1065 = vmatprep.subr.mxu0 0.0
  %1066 = vmatpush1.msra.mxu0 %v1013
  %1067 = vmatprep.subr.mxu0 0.0
  %1068 = vmatpush1.msra.mxu0 %v1012
  %1069 = vmatprep.subr.mxu0 0.0
  %1070 = vmatpush1.msra.mxu0 %v1011
  %1071 = vmatprep.subr.mxu0 0.0
  %1072 = vmatpush2.msra.mxu0 0.0
  %1073 = vmatprep.subr.mxu0 0.0
  %1074 = vmatpush2.msra.mxu0 0.0
  %1075 = vmatprep.subr.mxu0 0.0
  %1076 = vmatpush2.msra.mxu0 0.0
  %1077 = vmatprep.subr.mxu0 0.0
  %1078 = vmatpush2.msra.mxu0 0.0
  %1079 = vmatprep.subr.mxu0 0.0
  %1080 = vmatpush2.msra.mxu0 0.0
  %1081 = vmatprep.subr.mxu0 0.0
  %1082 = vmatpush2.msra.mxu0 0.0
  %1083 = vmatprep.subr.mxu0 0.0
  %1084 = vmatpush2.msra.mxu0 0.0
  %1085 = vmatprep.subr.mxu0 0.0
  %1086 = vmatpush2.msra.mxu0 0.0
  %1087 = vmatprep.subr.mxu0 0.0
  %1088 = vmatpush2.msra.mxu0 0.0
  %1089 = vmatprep.subr.mxu0 0.0
  %1090 = vmatpush2.msra.mxu0 0.0
  %1091 = vmatprep.subr.mxu0 0.0
  %1092 = vmatpush2.msra.mxu0 0.0
  %1093 = vmatprep.subr.mxu0 0.0
  %1094 = vmatpush2.msra.mxu0 0.0
  %1095 = vmatprep.subr.mxu0 0.0
  %1096 = vmatpush2.msra.mxu0 0.0
  %1097 = vmatprep.subr.mxu0 0.0
  %1098 = vmatpush2.msra.mxu0 0.0
  %1099 = vmatprep.subr.mxu0 0.0
  %1100 = vmatpush2.msra.mxu0 0.0
  %1101 = vmatprep.subr.mxu0 0.0
  %1102 = vmatpush2.msra.mxu0 0.0
  %1103 = vmatprep.mubr.f32.mxu0 0.0
  %1104 = vmatmul.mubr.f32.gmra.mxu0 %v1016
  %v1105 = vpop.f32.mrf.mxu0
  %v1106 = vadd.f32 0.0, %v1105
  %v1107 = vpop.f32.mrf.mxu0
  %1108 = vmatprep.mubr.f32.mxu0 0.0
  %1109 = vmatmul.mubr.f32.gmra.mxu0 %v1019
  %v1110 = vpop.f32.mrf.mxu0
  %v1111 = vadd.f32 0.0, %v1110
  %v1112 = vpop.f32.mrf.mxu0
  %1113 = vmatprep.mubr.f32.mxu0 0.0
  %1114 = vmatmul.mubr.f32.gmra.mxu0 %v1022
  %v1115 = vpop.f32.mrf.mxu0
  %v1116 = vadd.f32 0.0, %v1115
  %v1117 = vpop.f32.mrf.mxu0
  %1118 = vmatprep.mubr.f32.mxu0 0.0
  %1119 = vmatmul.mubr.f32.gmra.mxu0 %v1025
  %v1120 = vpop.f32.mrf.mxu0
  %v1121 = vadd.f32 0.0, %v1120
  %v1122 = vpop.f32.mrf.mxu0
  %1123 = vmatprep.mubr.f32.mxu0 0.0
  %1124 = vmatmul.mubr.f32.gmra.mxu0 %v1028
  %v1125 = vpop.f32.mrf.mxu0
  %v1126 = vadd.f32 0.0, %v1125
  %v1127 = vpop.f32.mrf.mxu0
  %1128 = vmatprep.mubr.f32.mxu0 0.0
  %1129 = vmatmul.mubr.f32.gmra.mxu0 %v1031
  %v1130 = vpop.f32.mrf.mxu0
  %v1131 = vadd.f32 0.0, %v1130
  %v1132 = vpop.f32.mrf.mxu0
  %1133 = vmatprep.mubr.f32.mxu0 0.0
  %1134 = vmatmul.mubr.f32.gmra.mxu0 %v1034
  %v1135 = vpop.f32.mrf.mxu0
  %v1136 = vadd.f32 0.0, %v1135
  %v1137 = vpop.f32.mrf.mxu0
  %1138 = vmatprep.mubr.f32.mxu0 0.0
  %1139 = vmatmul.mubr.f32.gmra.mxu0 %v1037
  %v1140 = vpop.f32.mrf.mxu0
  %v1141 = vadd.f32 0.0, %v1140
  %v1142 = vpop.f32.mrf.mxu0
  %1143 = vdwg.mxu0
  %vm1144 = vcmask 523264
  %v1146 = vsel %vm1144, %v995, 0
  %v1149 = vsel %vm1144, %v996, 0
  %v1152 = vsel %vm1144, %v997, 0
  %v1155 = vsel %vm1144, %v998, 0
  %v1158 = vsel %vm1144, %v999, 0
  %v1161 = vsel %vm1144, %v1000, 0
  %v1164 = vsel %vm1144, %v1001, 0
  %v1167 = vsel %vm1144, %v1002, 0
  %1169 = vmatprep.subr.mxu0 0.0
  %1170 = vmatpush1.msra.mxu0 0.0
  %1171 = vmatprep.subr.mxu0 0.0
  %1172 = vmatpush1.msra.mxu0 0.0
  %1173 = vmatprep.subr.mxu0 0.0
  %1174 = vmatpush1.msra.mxu0 0.0
  %1175 = vmatprep.subr.mxu0 0.0
  %1176 = vmatpush1.msra.mxu0 0.0
  %1177 = vmatprep.subr.mxu0 0.0
  %1178 = vmatpush1.msra.mxu0 0.0
  %1179 = vmatprep.subr.mxu0 0.0
  %1180 = vmatpush1.msra.mxu0 0.0
  %1181 = vmatprep.subr.mxu0 0.0
  %1182 = vmatpush1.msra.mxu0 0.0
  %1183 = vmatprep.subr.mxu0 0.0
  %1184 = vmatpush1.msra.mxu0 0.0
  %1185 = vmatprep.subr.mxu0 0.0
  %1186 = vmatpush1.msra.mxu0 %v994
  %1187 = vmatprep.subr.mxu0 0.0
  %1188 = vmatpush1.msra.mxu0 %v993
  %1189 = vmatprep.subr.mxu0 0.0
  %1190 = vmatpush1.msra.mxu0 %v992
  %1191 = vmatprep.subr.mxu0 0.0
  %1192 = vmatpush1.msra.mxu0 %v991
  %1193 = vmatprep.subr.mxu0 0.0
  %1194 = vmatpush1.msra.mxu0 %v990
  %1195 = vmatprep.subr.mxu0 0.0
  %1196 = vmatpush1.msra.mxu0 %v989
  %1197 = vmatprep.subr.mxu0 0.0
  %1198 = vmatpush1.msra.mxu0 %v988
  %1199 = vmatprep.subr.mxu0 0.0
  %1200 = vmatpush1.msra.mxu0 %v987
  %1201 = vmatprep.subr.mxu0 0.0
  %1202 = vmatpush2.msra.mxu0 0.0
  %1203 = vmatprep.subr.mxu0 0.0
  %1204 = vmatpush2.msra.mxu0 0.0
  %1205 = vmatprep.subr.mxu0 0.0
  %1206 = vmatpush2.msra.mxu0 0.0
  %1207 = vmatprep.subr.mxu0 0.0
  %1208 = vmatpush2.msra.mxu0 0.0
  %1209 = vmatprep.subr.mxu0 0.0
  %1210 = vmatpush2.msra.mxu0 0.0
  %1211 = vmatprep.subr.mxu0 0.0
  %1212 = vmatpush2.msra.mxu0 0.0
  %1213 = vmatprep.subr.mxu0 0.0
  %1214 = vmatpush2.msra.mxu0 0.0
  %1215 = vmatprep.subr.mxu0 0.0
  %1216 = vmatpush2.msra.mxu0 0.0
  %1217 = vmatprep.subr.mxu0 0.0
  %1218 = vmatpush2.msra.mxu0 0.0
  %1219 = vmatprep.subr.mxu0 0.0
  %1220 = vmatpush2.msra.mxu0 0.0
  %1221 = vmatprep.subr.mxu0 0.0
  %1222 = vmatpush2.msra.mxu0 0.0
  %1223 = vmatprep.subr.mxu0 0.0
  %1224 = vmatpush2.msra.mxu0 0.0
  %1225 = vmatprep.subr.mxu0 0.0
  %1226 = vmatpush2.msra.mxu0 0.0
  %1227 = vmatprep.subr.mxu0 0.0
  %1228 = vmatpush2.msra.mxu0 0.0
  %1229 = vmatprep.subr.mxu0 0.0
  %1230 = vmatpush2.msra.mxu0 0.0
  %1231 = vmatprep.subr.mxu0 0.0
  %1232 = vmatpush2.msra.mxu0 0.0
  %1233 = vmatprep.mubr.f32.mxu0 0.0
  %1234 = vmatmul.mubr.f32.gmra.mxu0 %v1146
  %v1235 = vpop.f32.mrf.mxu0
  %v1236 = vadd.f32 %v1106, %v1235
  %v1237 = vpop.f32.mrf.mxu0
  %1238 = vmatprep.mubr.f32.mxu0 0.0
  %1239 = vmatmul.mubr.f32.gmra.mxu0 %v1149
  %v1240 = vpop.f32.mrf.mxu0
  %v1241 = vadd.f32 %v1111, %v1240
  %v1242 = vpop.f32.mrf.mxu0
  %1243 = vmatprep.mubr.f32.mxu0 0.0
  %1244 = vmatmul.mubr.f32.gmra.mxu0 %v1152
  %v1245 = vpop.f32.mrf.mxu0
  %v1246 = vadd.f32 %v1116, %v1245
  %v1247 = vpop.f32.mrf.mxu0
  %1248 = vmatprep.mubr.f32.mxu0 0.0
  %1249 = vmatmul.mubr.f32.gmra.mxu0 %v1155
  %v1250 = vpop.f32.mrf.mxu0
  %v1251 = vadd.f32 %v1121, %v1250
  %v1252 = vpop.f32.mrf.mxu0
  %1253 = vmatprep.mubr.f32.mxu0 0.0
  %1254 = vmatmul.mubr.f32.gmra.mxu0 %v1158
  %v1255 = vpop.f32.mrf.mxu0
  %v1256 = vadd.f32 %v1126, %v1255
  %v1257 = vpop.f32.mrf.mxu0
  %1258 = vmatprep.mubr.f32.mxu0 0.0
  %1259 = vmatmul.mubr.f32.gmra.mxu0 %v1161
  %v1260 = vpop.f32.mrf.mxu0
  %v1261 = vadd.f32 %v1131, %v1260
  %v1262 = vpop.f32.mrf.mxu0
  %1263 = vmatprep.mubr.f32.mxu0 0.0
  %1264 = vmatmul.mubr.f32.gmra.mxu0 %v1164
  %v1265 = vpop.f32.mrf.mxu0
  %v1266 = vadd.f32 %v1136, %v1265
  %v1267 = vpop.f32.mrf.mxu0
  %1268 = vmatprep.mubr.f32.mxu0 0.0
  %1269 = vmatmul.mubr.f32.gmra.mxu0 %v1167
  %v1270 = vpop.f32.mrf.mxu0
  %v1271 = vadd.f32 %v1141, %v1270
  %v1272 = vpop.f32.mrf.mxu0
  %1273 = vdwg.mxu0
  %1274 = vset.pattern.permute.xlu0 9
  %1275 = vperm.xlu0 %1274, %v38
  %v1276 = vpop.permute.xlu0 %1275
  %1278 = vset.pattern.permute.xlu0 9
  %1279 = vperm.xlu0 %1278, %v39
  %v1280 = vpop.permute.xlu0 %1279
  %1282 = vset.pattern.permute.xlu0 9
  %1283 = vperm.xlu0 %1282, %v40
  %v1284 = vpop.permute.xlu0 %1283
  %1286 = vset.pattern.permute.xlu0 9
  %1287 = vperm.xlu0 %1286, %v41
  %v1288 = vpop.permute.xlu0 %1287
  %1290 = vset.pattern.permute.xlu0 9
  %1291 = vperm.xlu0 %1290, %v42
  %v1292 = vpop.permute.xlu0 %1291
  %1294 = vset.pattern.permute.xlu0 9
  %1295 = vperm.xlu0 %1294, %v43
  %v1296 = vpop.permute.xlu0 %1295
  %1298 = vset.pattern.permute.xlu0 9
  %1299 = vperm.xlu0 %1298, %v44
  %v1300 = vpop.permute.xlu0 %1299
  %1302 = vset.pattern.permute.xlu0 9
  %1303 = vperm.xlu0 %1302, %v45
  %v1304 = vpop.permute.xlu0 %1303
  %v1306 = vadd.f32 %v1236, %v1276
  %v1307 = vadd.f32 %v1241, %v1280
  %v1308 = vadd.f32 %v1246, %v1284
  %v1309 = vadd.f32 %v1251, %v1288
  %v1310 = vadd.f32 %v1256, %v1292
  %v1311 = vadd.f32 %v1261, %v1296
  %v1312 = vadd.f32 %v1266, %v1300
  %v1313 = vadd.f32 %v1271, %v1304
  %v1314 = vtanh.pop %v1306
  %v1315 = vtanh.pop %v1307
  %v1316 = vtanh.pop %v1308
  %v1317 = vtanh.pop %v1309
  %v1318 = vtanh.pop %v1310
  %v1319 = vtanh.pop %v1311
  %v1320 = vtanh.pop %v1312
  %v1321 = vtanh.pop %v1313
  %v1322 = vld [vmem:[%s10] sm:$0xff]
  %1323 = vset.pattern.permute.xlu0 10
  %1324 = vperm.xlu0 %1323, %v38
  %v1325 = vpop.permute.xlu0 %1324
  %v1328 = vsel %vm1144, %v1322, 0
  %1330 = vmatprep.subr.mxu0 0.0
  %1331 = vmatpush1.msra.mxu0 0.0
  %1332 = vmatprep.subr.mxu0 0.0
  %1333 = vmatpush1.msra.mxu0 0.0
  %1334 = vmatprep.subr.mxu0 0.0
  %1335 = vmatpush1.msra.mxu0 0.0
  %1336 = vmatprep.subr.mxu0 0.0
  %1337 = vmatpush1.msra.mxu0 0.0
  %1338 = vmatprep.subr.mxu0 0.0
  %1339 = vmatpush1.msra.mxu0 0.0
  %1340 = vmatprep.subr.mxu0 0.0
  %1341 = vmatpush1.msra.mxu0 0.0
  %1342 = vmatprep.subr.mxu0 0.0
  %1343 = vmatpush1.msra.mxu0 0.0
  %1344 = vmatprep.subr.mxu0 0.0
  %1345 = vmatpush1.msra.mxu0 0.0
  %1346 = vmatprep.subr.mxu0 0.0
  %1347 = vmatpush1.msra.mxu0 %v1321
  %1348 = vmatprep.subr.mxu0 0.0
  %1349 = vmatpush1.msra.mxu0 %v1320
  %1350 = vmatprep.subr.mxu0 0.0
  %1351 = vmatpush1.msra.mxu0 %v1319
  %1352 = vmatprep.subr.mxu0 0.0
  %1353 = vmatpush1.msra.mxu0 %v1318
  %1354 = vmatprep.subr.mxu0 0.0
  %1355 = vmatpush1.msra.mxu0 %v1317
  %1356 = vmatprep.subr.mxu0 0.0
  %1357 = vmatpush1.msra.mxu0 %v1316
  %1358 = vmatprep.subr.mxu0 0.0
  %1359 = vmatpush1.msra.mxu0 %v1315
  %1360 = vmatprep.subr.mxu0 0.0
  %1361 = vmatpush1.msra.mxu0 %v1314
  %1362 = vmatprep.subr.mxu0 0.0
  %1363 = vmatpush2.msra.mxu0 0.0
  %1364 = vmatprep.subr.mxu0 0.0
  %1365 = vmatpush2.msra.mxu0 0.0
  %1366 = vmatprep.subr.mxu0 0.0
  %1367 = vmatpush2.msra.mxu0 0.0
  %1368 = vmatprep.subr.mxu0 0.0
  %1369 = vmatpush2.msra.mxu0 0.0
  %1370 = vmatprep.subr.mxu0 0.0
  %1371 = vmatpush2.msra.mxu0 0.0
  %1372 = vmatprep.subr.mxu0 0.0
  %1373 = vmatpush2.msra.mxu0 0.0
  %1374 = vmatprep.subr.mxu0 0.0
  %1375 = vmatpush2.msra.mxu0 0.0
  %1376 = vmatprep.subr.mxu0 0.0
  %1377 = vmatpush2.msra.mxu0 0.0
  %1378 = vmatprep.subr.mxu0 0.0
  %1379 = vmatpush2.msra.mxu0 0.0
  %1380 = vmatprep.subr.mxu0 0.0
  %1381 = vmatpush2.msra.mxu0 0.0
  %1382 = vmatprep.subr.mxu0 0.0
  %1383 = vmatpush2.msra.mxu0 0.0
  %1384 = vmatprep.subr.mxu0 0.0
  %1385 = vmatpush2.msra.mxu0 0.0
  %1386 = vmatprep.subr.mxu0 0.0
  %1387 = vmatpush2.msra.mxu0 0.0
  %1388 = vmatprep.subr.mxu0 0.0
  %1389 = vmatpush2.msra.mxu0 0.0
  %1390 = vmatprep.subr.mxu0 0.0
  %1391 = vmatpush2.msra.mxu0 0.0
  %1392 = vmatprep.subr.mxu0 0.0
  %1393 = vmatpush2.msra.mxu0 0.0
  %1394 = vmatprep.mubr.f32.mxu0 0.0
  %1395 = vmatmul.mubr.f32.gmra.mxu0 %v1328
  %v1396 = vpop.f32.mrf.mxu0
  %v1397 = vadd.f32 %v1325, %v1396
  %v1398 = vpop.f32.mrf.mxu0
  %1399 = vdwg.mxu0
  %1400 = vset.pattern.permute.xlu0 11
  %1401 = vperm.xlu0 %1400, %v38
  %v1402 = vpop.permute.xlu0 %1401
  %v1404 = vmul.f32 %v1397, %v1402
  %1405 = vset.pattern.permute.xlu0 12
  %1406 = vperm.xlu0 %1405, %v38
  %v1407 = vpop.permute.xlu0 %1406
  %v1409 = vadd.f32 %v1404, %v1407
  %vm1410 = vcmask 15360
  %1411 = vst.msk [vmem:[%s11] sm:$0xff] %vm1410, %v1409
  // Predicated region
  $region46: #{tpu_custom_call.1} parent=0 // pred_check
    _
  $region47: #{tpu_custom_call.1} parent=0 // pred_check_branch
    %1413 = sbr.rel (0) target = $region49
  $region48: #{tpu_custom_call.1} parent=0 // pred_region
    _
  $region49: #{tpu_custom_call.1} parent=0 // pred_fallthru
    _
  // Predicated region
  $region50: #{tpu_custom_call.1} parent=0 // pred_check
    _
  $region51: #{tpu_custom_call.1} parent=0 // pred_check_branch
    %1415 = sbr.rel (0) target = $region53
  $region52: #{tpu_custom_call.1} parent=0 // pred_region
    _
  $region53: #{tpu_custom_call.1} parent=0 // pred_fallthru
    _

</llo_original>
